<compile_context>
chip_gen: v5e
topology: v5e:2x2
jax: 0.10.0
libtpu: 0.0.40
codegen_flags: <defaults>
</compile_context>

<pallas_src>
import jax
import jax.numpy as jnp
import numpy as np
from jax.experimental import pallas as pl
from jax.experimental.pallas import tpu as pltpu

# ---- module hyper-parameters (synthetic, deterministic init) ----------------
FEAT_DIM = 32
MAX_NUM_ATOMS = 4
MAX_AA_TYPES = 22
MAX_RELPOS = 32
CA_IDX = 1                                # BBHeavyAtom.CA == 1 (N, CA, C, O)

V_AA = MAX_AA_TYPES * MAX_AA_TYPES        # 484 aa-pair embedding rows
V_AA_PAD = 512                            # aa section padded to a lane multiple
V_RP = 2 * MAX_RELPOS + 1                 # 65 relpos embedding rows
SENTINEL_COL = V_AA_PAD + V_RP            # 577: "different chain" -> b1-only row
V_TOT = V_AA_PAD + 128                    # 640 rows in the fused table

PAIR_SHIFT = 10                           # packed int32: (aa-pair idx << 10) | rel column
FIELD_MASK = (1 << PAIR_SHIFT) - 1        # 1023

TP_MAX = 2048                             # pair rows per grid step

# Static packing-overflow guards (per review): both fields must fit 10 bits.
assert MAX_AA_TYPES * MAX_AA_TYPES <= FIELD_MASK + 1
assert SENTINEL_COL <= FIELD_MASK
assert V_TOT % 128 == 0


# ---- Pallas kernel -----------------------------------------------------------
def _pair_encoder_kernel(packed_ref, mask_ref, wc_hi_ref, wc_lo_ref,
                         w2t_ref, b2_ref, w3t_ref, b3_ref, out_ref):
    tp = out_ref.shape[2]                                    # pair rows (lanes)

    packed = packed_ref[0]                                   # (1, TP) int32
    rel_col = jnp.bitwise_and(packed, FIELD_MASK)            # (1, TP) in [512, 577] (or 0 pad)
    pair_col = jnp.right_shift(packed, PAIR_SHIFT)           # (1, TP) in [0, 483]

    # Transposed fused one-hot (V_TOT, TP): row r is selected for pair lane p
    # iff r is the pair's aa-pair row (< 512) or its relpos row (>= 512; the
    # different-chain sentinel row carries only b1).  Compares are int32; a
    # single (safe bool->f32->bf16) convert makes the exact bf16 one-hot.
    row = jax.lax.broadcasted_iota(jnp.int32, (V_TOT, tp), 0)
    sel = jnp.logical_or(row == pair_col, row == rel_col)
    onehot = sel.astype(jnp.float32).astype(jnp.bfloat16)    # exact 0/1 values

    # Layer 1 (embeddings + Linear-1 + b1 folded): two exact bf16 MXU passes.
    h = jnp.dot(wc_hi_ref[...], onehot, preferred_element_type=jnp.float32)
    h = h + jnp.dot(wc_lo_ref[...], onehot, preferred_element_type=jnp.float32)
    h = jnp.maximum(h, 0.0)                                  # (F, TP)

    h = jnp.dot(w2t_ref[...], h, preferred_element_type=jnp.float32) + b2_ref[...]
    h = jnp.maximum(h, 0.0)
    y = jnp.dot(w3t_ref[...], h, preferred_element_type=jnp.float32) + b3_ref[...]

    y = y * mask_ref[0]                                      # (F,TP) * (1,TP) raw float mask
    out_ref[...] = y[None].astype(out_ref.dtype)             # (1, F, TP) lane-dense store


# ---- wrapper -----------------------------------------------------------------
def _fuse_tables(params):
    """Fold Linear-1 (and b1) into one (V_TOT, F) table, transposed and split
    into an exact bf16 hi/lo pair (hi + lo == f32 table to ~2^-16 relative)."""
    F = params["w_aa"].shape[1]
    w1, b1 = params["w1"], params["b1"]                       # (2F, F), (1, F)
    waa1 = params["w_aa"] @ w1[:F, :]                         # (V_AA, F)
    wrp1 = params["w_rp"] @ w1[F:, :]                         # (V_RP, F)
    wcomb = jnp.zeros((V_TOT, F), jnp.float32)
    wcomb = wcomb.at[:V_AA, :].set(waa1)
    wcomb = wcomb.at[V_AA_PAD:V_AA_PAD + V_RP, :].set(wrp1 + b1)   # b1 folded here
    wcomb = wcomb.at[SENTINEL_COL, :].set(b1[0])                   # diff-chain row
    wct = wcomb.T                                             # (F, V_TOT)
    wc_hi = wct.astype(jnp.bfloat16)
    wc_lo = (wct - wc_hi.astype(jnp.float32)).astype(jnp.bfloat16)
    return wc_hi, wc_lo


def residue_pair_encoder(params, aa, res_nb, chain_nb, mask_atoms):
    """aa/res_nb/chain_nb: (N, L) int32; mask_atoms: (N, L, A) -> (N, L, L, F)."""
    N, L = aa.shape
    P = L * L
    F = params["w_aa"].shape[1]

    # ---- glue: one packed int32 per pair (aa-pair idx | relpos column) and the
    # raw float CA-mask product (matches the reference for non-binary masks too).
    aa = aa.astype(jnp.int32)
    pair_idx = aa[:, :, None] * MAX_AA_TYPES + aa[:, None, :]             # (N,L,L)
    rel = jnp.clip(res_nb[:, :, None] - res_nb[:, None, :],
                   -MAX_RELPOS, MAX_RELPOS) + MAX_RELPOS                  # [0, 64]
    same_chain = chain_nb[:, :, None] == chain_nb[:, None, :]
    rel_col = jnp.where(same_chain, V_AA_PAD + rel, SENTINEL_COL).astype(jnp.int32)
    packed = (jnp.left_shift(pair_idx, PAIR_SHIFT) + rel_col).reshape(N, P)

    mask_res = mask_atoms[:, :, CA_IDX].astype(jnp.float32)
    mask_pair = (mask_res[:, :, None] * mask_res[:, None, :]).reshape(N, P)

    # ---- tiling: large lane-major pair tiles; pad P up to a multiple of TP
    TP = min(TP_MAX, 128 * ((P + 127) // 128))
    PAD_P = ((P + TP - 1) // TP) * TP
    if PAD_P != P:
        packed = jnp.pad(packed, ((0, 0), (0, PAD_P - P)))     # padded pairs: mask = 0
        mask_pair = jnp.pad(mask_pair, ((0, 0), (0, PAD_P - P)))
    packed = packed.reshape(N, 1, PAD_P)                       # lane-major layout
    mask_pair = mask_pair.reshape(N, 1, PAD_P)

    wc_hi, wc_lo = _fuse_tables(params)
    w2t = params["w2"].T                                       # (F, F)
    w3t = params["w3"].T
    b2c = params["b2"].T                                       # (F, 1)
    b3c = params["b3"].T

    grid = (N, PAD_P // TP)

    def full_spec(shape):
        return pl.BlockSpec(shape, lambda n, t, _r=len(shape): (0,) * _r)

    out = pl.pallas_call(
        _pair_encoder_kernel,
        out_shape=jax.ShapeDtypeStruct((N, F, PAD_P), jnp.float32),
        grid_spec=pltpu.PrefetchScalarGridSpec(
            num_scalar_prefetch=0,
            grid=grid,
            in_specs=[
                pl.BlockSpec((1, 1, TP), lambda n, t: (n, 0, t)),   # packed pair indices
                pl.BlockSpec((1, 1, TP), lambda n, t: (n, 0, t)),   # float pair mask
                full_spec(wc_hi.shape), full_spec(wc_lo.shape),
                full_spec(w2t.shape), full_spec(b2c.shape),
                full_spec(w3t.shape), full_spec(b3c.shape),
            ],
            out_specs=pl.BlockSpec((1, F, TP), lambda n, t: (n, 0, t)),
        ),
        compiler_params=pltpu.CompilerParams(
            dimension_semantics=("parallel", "parallel"),
            vmem_limit_bytes=32 * 1024 * 1024,
        ),
    )(packed, mask_pair, wc_hi, wc_lo, w2t, b2c, w3t, b3c)

    if PAD_P != P:
        out = out[:, :, :P]
    out = out.reshape(N, F, L, L)
    return jnp.transpose(out, (0, 2, 3, 1))                    # (N, L, L, F)


# ---- pure-JAX reference (mirrors the PyTorch forward) ------------------------
def reference(params, aa, res_nb, chain_nb, mask_atoms):
    mask_res = mask_atoms[:, :, CA_IDX].astype(jnp.float32)
    mask_pair = mask_res[:, :, None] * mask_res[:, None, :]
    aa_pair = aa[:, :, None] * MAX_AA_TYPES + aa[:, None, :]
    feat_aa = params["w_aa"][aa_pair]
    same_chain = (chain_nb[:, :, None] == chain_nb[:, None, :])
    relpos = jnp.clip(res_nb[:, :, None] - res_nb[:, None, :],
                      -MAX_RELPOS, MAX_RELPOS)
    feat_rp = params["w_rp"][relpos + MAX_RELPOS] * same_chain[..., None]
    x = jnp.concatenate([feat_aa, feat_rp], axis=-1)
    h = jax.nn.relu(x @ params["w1"] + params["b1"][0])
    h = jax.nn.relu(h @ params["w2"] + params["b2"][0])
    y = h @ params["w3"] + params["b3"][0]
    return y * mask_pair[..., None]


if __name__ == "__main__":
    N, L, A, F = 2, 8, MAX_NUM_ATOMS, FEAT_DIM

    key = jax.random.PRNGKey(0)
    keys = jax.random.split(key, 12)

    # Deterministic synthetic parameters.  Linear weights stored (in, out) so
    # that y = x @ W + b (equivalent to torch's x @ W.T with W=(out,in)).
    params = {
        "w_aa": jax.random.normal(keys[0], (V_AA, F), jnp.float32) * 0.1,
        "w_rp": jax.random.normal(keys[1], (V_RP, F), jnp.float32) * 0.1,
        "w1": jax.random.normal(keys[2], (2 * F, F), jnp.float32) * 0.1,
        "b1": jax.random.normal(keys[3], (1, F), jnp.float32) * 0.1,
        "w2": jax.random.normal(keys[4], (F, F), jnp.float32) * 0.1,
        "b2": jax.random.normal(keys[5], (1, F), jnp.float32) * 0.1,
        "w3": jax.random.normal(keys[6], (F, F), jnp.float32) * 0.1,
        "b3": jax.random.normal(keys[7], (1, F), jnp.float32) * 0.1,
    }

    aa = jax.random.randint(keys[8], (N, L), 0, MAX_AA_TYPES, jnp.int32)
    res_nb = jax.random.randint(keys[9], (N, L), 0, 100, jnp.int32)
    chain_nb = jax.random.randint(keys[10], (N, L), 0, 2, jnp.int32)
    mask_atoms = (jax.random.uniform(keys[11], (N, L, A)) > 0.2).astype(jnp.float32)

    out = residue_pair_encoder(params, aa, res_nb, chain_nb, mask_atoms)
    out = jax.block_until_ready(out)
    assert out.shape == (N, L, L, F) and out.dtype == jnp.float32

    ref = reference(params, aa, res_nb, chain_nb, mask_atoms)
    np.testing.assert_allclose(np.asarray(out), np.asarray(ref),
                               atol=2e-4, rtol=1e-3)
    print("KERNEL_OK")
</pallas_src>

<mosaic_0001>
module attributes {stable_mosaic.version = 11 : i64} {
  func.func @_pair_encoder_kernel(%arg0: i32, %arg1: i32, %arg2: memref<1x1x128xi32, #tpu.memory_space<vmem>>, %arg3: memref<1x1x128xf32, #tpu.memory_space<vmem>>, %arg4: memref<32x640xbf16, #tpu.memory_space<vmem>>, %arg5: memref<32x640xbf16, #tpu.memory_space<vmem>>, %arg6: memref<32x32xf32, #tpu.memory_space<vmem>>, %arg7: memref<32x1xf32, #tpu.memory_space<vmem>>, %arg8: memref<32x32xf32, #tpu.memory_space<vmem>>, %arg9: memref<32x1xf32, #tpu.memory_space<vmem>>, %arg10: memref<1x32x128xf32, #tpu.memory_space<vmem>>) attributes {dimension_semantics = [#tpu.dimension_semantics<parallel>, #tpu.dimension_semantics<parallel>], iteration_bounds = array<i64: 2, 1>, scalar_prefetch = 0 : i64, scratch_operands = 0 : i64, tpu.core_type = #tpu.core_type<tc>, window_params = [{transform_indices = @transform_0, window_bounds = array<i64: 1, 1, 128>}, {transform_indices = @transform_1, window_bounds = array<i64: 1, 1, 128>}, {pipeline_mode = #tpu.pipeline_mode<synchronous>, transform_indices = @transform_2, window_bounds = array<i64: 32, 640>}, {pipeline_mode = #tpu.pipeline_mode<synchronous>, transform_indices = @transform_3, window_bounds = array<i64: 32, 640>}, {pipeline_mode = #tpu.pipeline_mode<synchronous>, transform_indices = @transform_4, window_bounds = array<i64: 32, 32>}, {pipeline_mode = #tpu.pipeline_mode<synchronous>, transform_indices = @transform_5, window_bounds = array<i64: 32, 1>}, {pipeline_mode = #tpu.pipeline_mode<synchronous>, transform_indices = @transform_6, window_bounds = array<i64: 32, 32>}, {pipeline_mode = #tpu.pipeline_mode<synchronous>, transform_indices = @transform_7, window_bounds = array<i64: 32, 1>}, {transform_indices = @transform_8, window_bounds = array<i64: 1, 32, 128>}]} {
    %c0 = arith.constant 0 : index
    %c0_0 = arith.constant 0 : index
    %c0_1 = arith.constant 0 : index
    %0 = vector.load %arg2[%c0, %c0_0, %c0_1] : memref<1x1x128xi32, #tpu.memory_space<vmem>>, vector<1x1x128xi32>
    %1 = vector.shape_cast %0 : vector<1x1x128xi32> to vector<1x128xi32>
    %c1023_i32 = arith.constant 1023 : i32
    %2 = vector.broadcast %c1023_i32 : i32 to vector<1x128xi32>
    %3 = arith.andi %1, %2 : vector<1x128xi32>
    %c10_i32 = arith.constant 10 : i32
    %4 = vector.broadcast %c10_i32 : i32 to vector<1x128xi32>
    %5 = arith.shrsi %1, %4 : vector<1x128xi32>
    %6 = tpu.iota {dimensions = array<i32: 0>} : vector<640x128xi32>
    %7 = vector.broadcast %5 : vector<1x128xi32> to vector<640x128xi32>
    %8 = arith.cmpi eq, %6, %7 : vector<640x128xi32>
    %9 = vector.broadcast %3 : vector<1x128xi32> to vector<640x128xi32>
    %10 = arith.cmpi eq, %6, %9 : vector<640x128xi32>
    %11 = arith.ori %8, %10 : vector<640x128xi1>
    %12 = arith.extui %11 : vector<640x128xi1> to vector<640x128xi32>
    %13 = arith.sitofp %12 : vector<640x128xi32> to vector<640x128xf32>
    %14 = arith.truncf %13 : vector<640x128xf32> to vector<640x128xbf16>
    %c0_2 = arith.constant 0 : index
    %c0_3 = arith.constant 0 : index
    %15 = vector.load %arg4[%c0_2, %c0_3] : memref<32x640xbf16, #tpu.memory_space<vmem>>, vector<32x640xbf16>
    %cst = arith.constant dense<0.000000e+00> : vector<32x128xf32>
    %16 = tpu.matmul %15, %14, %cst {dimension_numbers = #tpu.dot_dimension_numbers<[1], [0], [0], [1], [0, 0, 1, 1], [], []>} : vector<32x640xbf16>, vector<640x128xbf16>, vector<32x128xf32> -> vector<32x128xf32>
    %c0_4 = arith.constant 0 : index
    %c0_5 = arith.constant 0 : index
    %17 = vector.load %arg5[%c0_4, %c0_5] : memref<32x640xbf16, #tpu.memory_space<vmem>>, vector<32x640xbf16>
    %cst_6 = arith.constant dense<0.000000e+00> : vector<32x128xf32>
    %18 = tpu.matmul %17, %14, %cst_6 {dimension_numbers = #tpu.dot_dimension_numbers<[1], [0], [0], [1], [0, 0, 1, 1], [], []>} : vector<32x640xbf16>, vector<640x128xbf16>, vector<32x128xf32> -> vector<32x128xf32>
    %19 = arith.addf %16, %18 : vector<32x128xf32>
    %cst_7 = arith.constant 0.000000e+00 : f32
    %20 = vector.broadcast %cst_7 : f32 to vector<32x128xf32>
    %21 = arith.maximumf %19, %20 : vector<32x128xf32>
    %c0_8 = arith.constant 0 : index
    %c0_9 = arith.constant 0 : index
    %22 = vector.load %arg6[%c0_8, %c0_9] : memref<32x32xf32, #tpu.memory_space<vmem>>, vector<32x32xf32>
    %cst_10 = arith.constant dense<0.000000e+00> : vector<32x128xf32>
    %23 = tpu.matmul %22, %21, %cst_10 {dimension_numbers = #tpu.dot_dimension_numbers<[1], [0], [0], [1], [0, 0, 1, 1], [], []>} : vector<32x32xf32>, vector<32x128xf32>, vector<32x128xf32> -> vector<32x128xf32>
    %c0_11 = arith.constant 0 : index
    %c0_12 = arith.constant 0 : index
    %24 = vector.load %arg7[%c0_11, %c0_12] : memref<32x1xf32, #tpu.memory_space<vmem>>, vector<32x1xf32>
    %25 = vector.broadcast %24 : vector<32x1xf32> to vector<32x128xf32>
    %26 = arith.addf %23, %25 : vector<32x128xf32>
    %cst_13 = arith.constant 0.000000e+00 : f32
    %27 = vector.broadcast %cst_13 : f32 to vector<32x128xf32>
    %28 = arith.maximumf %26, %27 : vector<32x128xf32>
    %c0_14 = arith.constant 0 : index
    %c0_15 = arith.constant 0 : index
    %29 = vector.load %arg8[%c0_14, %c0_15] : memref<32x32xf32, #tpu.memory_space<vmem>>, vector<32x32xf32>
    %cst_16 = arith.constant dense<0.000000e+00> : vector<32x128xf32>
    %30 = tpu.matmul %29, %28, %cst_16 {dimension_numbers = #tpu.dot_dimension_numbers<[1], [0], [0], [1], [0, 0, 1, 1], [], []>} : vector<32x32xf32>, vector<32x128xf32>, vector<32x128xf32> -> vector<32x128xf32>
    %c0_17 = arith.constant 0 : index
    %c0_18 = arith.constant 0 : index
    %31 = vector.load %arg9[%c0_17, %c0_18] : memref<32x1xf32, #tpu.memory_space<vmem>>, vector<32x1xf32>
    %32 = vector.broadcast %31 : vector<32x1xf32> to vector<32x128xf32>
    %33 = arith.addf %30, %32 : vector<32x128xf32>
    %c0_19 = arith.constant 0 : index
    %c0_20 = arith.constant 0 : index
    %c0_21 = arith.constant 0 : index
    %34 = vector.load %arg3[%c0_19, %c0_20, %c0_21] : memref<1x1x128xf32, #tpu.memory_space<vmem>>, vector<1x1x128xf32>
    %35 = vector.shape_cast %34 : vector<1x1x128xf32> to vector<1x128xf32>
    %36 = vector.broadcast %35 : vector<1x128xf32> to vector<32x128xf32>
    %37 = arith.mulf %33, %36 : vector<32x128xf32>
    %38 = vector.shape_cast %37 : vector<32x128xf32> to vector<1x32x128xf32>
    %c0_22 = arith.constant 0 : index
    %c0_23 = arith.constant 0 : index
    %c0_24 = arith.constant 0 : index
    %39 = vector.load %arg10[%c0_22, %c0_23, %c0_24] : memref<1x32x128xf32, #tpu.memory_space<vmem>>, vector<1x32x128xf32>
    tpu.vector_store %arg10[%c0_22, %c0_23, %c0_24], %38 {strides = array<i32>} : memref<1x32x128xf32, #tpu.memory_space<vmem>>, vector<1x32x128xf32>,
    return
  }
  func.func @transform_0(%arg0: i32, %arg1: i32) -> (i32, i32, i32) {
    %c0_i32 = arith.constant 0 : i32
    %c0_i32_0 = arith.constant 0 : i32
    return %arg0, %c0_i32, %arg1 : i32, i32, i32
  }
  func.func @transform_1(%arg0: i32, %arg1: i32) -> (i32, i32, i32) {
    %c0_i32 = arith.constant 0 : i32
    %c0_i32_0 = arith.constant 0 : i32
    return %arg0, %c0_i32, %arg1 : i32, i32, i32
  }
  func.func @transform_2(%arg0: i32, %arg1: i32) -> (i32, i32) {
    %c0_i32 = arith.constant 0 : i32
    %c0_i32_0 = arith.constant 0 : i32
    %c0_i32_1 = arith.constant 0 : i32
    return %c0_i32, %c0_i32_0 : i32, i32
  }
  func.func @transform_3(%arg0: i32, %arg1: i32) -> (i32, i32) {
    %c0_i32 = arith.constant 0 : i32
    %c0_i32_0 = arith.constant 0 : i32
    %c0_i32_1 = arith.constant 0 : i32
    return %c0_i32, %c0_i32_0 : i32, i32
  }
  func.func @transform_4(%arg0: i32, %arg1: i32) -> (i32, i32) {
    %c0_i32 = arith.constant 0 : i32
    %c0_i32_0 = arith.constant 0 : i32
    %c0_i32_1 = arith.constant 0 : i32
    return %c0_i32, %c0_i32_0 : i32, i32
  }
  func.func @transform_5(%arg0: i32, %arg1: i32) -> (i32, i32) {
    %c0_i32 = arith.constant 0 : i32
    %c0_i32_0 = arith.constant 0 : i32
    %c0_i32_1 = arith.constant 0 : i32
    return %c0_i32, %c0_i32_0 : i32, i32
  }
  func.func @transform_6(%arg0: i32, %arg1: i32) -> (i32, i32) {
    %c0_i32 = arith.constant 0 : i32
    %c0_i32_0 = arith.constant 0 : i32
    %c0_i32_1 = arith.constant 0 : i32
    return %c0_i32, %c0_i32_0 : i32, i32
  }
  func.func @transform_7(%arg0: i32, %arg1: i32) -> (i32, i32) {
    %c0_i32 = arith.constant 0 : i32
    %c0_i32_0 = arith.constant 0 : i32
    %c0_i32_1 = arith.constant 0 : i32
    return %c0_i32, %c0_i32_0 : i32, i32
  }
  func.func @transform_8(%arg0: i32, %arg1: i32) -> (i32, i32, i32) {
    %c0_i32 = arith.constant 0 : i32
    %c0_i32_0 = arith.constant 0 : i32
    return %arg0, %c0_i32, %arg1 : i32, i32, i32
  }
}

</mosaic_0001>

<llo_original>
// kernel: tpu_custom_call.1
$region0: #{tpu_custom_call.1}
  #allocation0 [shape = 'u32[]', space=smem, size = 0x4, offset = 0x4, fixed_abs, tag = 'smem constant byte address 0x4 - core index']
  #allocation1 [shape = 'u32[72,128]{1,0:T(1,128)}', space=vmem, size = 0x9000, scoped, tag = 'internal scratch']
  %s0 = inlined_call_operand.hbm [shape: s32[2,1,128], index: 0, kind: input, shape index: {}]
  %s1 = inlined_call_operand.hbm [shape: f32[2,1,128], index: 1, kind: input, shape index: {}]
  %s2 = inlined_call_operand.hbm [shape: bf16[32,640], index: 2, kind: input, shape index: {}]
  %s3 = inlined_call_operand.hbm [shape: bf16[32,640], index: 3, kind: input, shape index: {}]
  %s4 = inlined_call_operand.vmem [shape: f32[32,32], index: 4, kind: input, shape index: {}]
  %s5 = inlined_call_operand.vmem [shape: f32[32,1], index: 5, kind: input, shape index: {}]
  %s6 = inlined_call_operand.vmem [shape: f32[32,32], index: 6, kind: input, shape index: {}]
  %s7 = inlined_call_operand.vmem [shape: f32[32,1], index: 7, kind: input, shape index: {}]
  %s8 = inlined_call_operand.hbm [shape: f32[2,32,128], index: 8, kind: output, shape index: {}]
  %s9 = sld [smem:[#allocation0]]
  $region81: #{tpu_custom_call.1} parent=0
    _
  %s11 = ssub.s32 1, %s9
  %s12 = scalar_select 0, %s11, %s9
  $region1: #{tpu_custom_call.1} parent=0
    #allocation2 [shape = 'u8[1024]{0}', space=vmem, size = 0x400, scoped, tag = 'input window, operand 0']
    #allocation3 [shape = 's32[2]{0}', space=sflag, size = 0x8, scoped, tag = 'scoped memory for tpu_custom_call.1']
    #allocation4 [shape = 's32[2]{0}', space=sflag, size = 0x8, scoped, tag = 'scoped memory for tpu_custom_call.1']
    #allocation5 [shape = 'u8[1024]{0}', space=vmem, size = 0x400, scoped, tag = 'input window, operand 1']
    #allocation6 [shape = 's32[2]{0}', space=sflag, size = 0x8, scoped, tag = 'scoped memory for tpu_custom_call.1']
    #allocation7 [shape = 'u8[40960]{0}', space=vmem, size = 0xa000, scoped, tag = 'input window, operand 2, single buffered']
    #allocation8 [shape = 'u8[40960]{0}', space=vmem, size = 0xa000, scoped, tag = 'input window, operand 3, single buffered']
    #allocation9 [shape = 's32[1]{0}', space=sflag, size = 0x4, scoped, tag = 'scoped memory for tpu_custom_call.1']
    #allocation10 [shape = 'u8[32768]{0}', space=vmem, size = 0x8000, scoped, tag = 'output window, operand 0']
    %13 = vsyncpa [#allocation3], 0
    %s14 = scalar_lea.sflag [#allocation3], 1
    %15 = vsyncpa %s14, 0
    %16 = vsyncpa [#allocation6], 0
    %s17 = scalar_lea.sflag [#allocation6], 1
    %18 = vsyncpa %s17, 0
    %19 = vsyncpa [#allocation9], 0
    %20 = vsyncpa [#allocation4], 0
    %s21 = scalar_lea.sflag [#allocation4], 1
    %22 = vsyncpa %s21, 0
    loop: start=0, step=1, limit=4
    $region2: #{tpu_custom_call.1} parent=1 // loop_pre_header
      _
    $region3: #{tpu_custom_call.1} parent=1 // loop_header
      %s24 = sphi 0, %s28
      %p25 = scmp.ge.s32.totalorder %s24, 4
      %s31 = sphi 0, %s43
      %s32 = sphi 0, %s39
      %s33 = sphi 0, %s31
      %s34 = sphi 0, %s32
      %s35 = sphi 0, %s33
      %s36 = sphi 0, %s34
      %s48 = sphi 0, %s50
      %s51 = sphi 0, %s48
      %s52 = sphi 0, %s51
      %s68 = sphi 0, %s52
      %s76 = sphi 0, %s78
      %s79 = sphi 0, %s76
      %s80 = sphi 0, %s79
      %s96 = sphi 0, %s80
      %s100 = sphi 0, %s100
      %s102 = sphi 0, %s100
      %s103 = sphi 0, %s102
      %s117 = sphi 0, %s103
      %s121 = sphi 0, %s121
      %s123 = sphi 0, %s121
      %s124 = sphi 0, %s123
      %s138 = sphi 0, %s124
      %s142 = sphi 0, %s142
      %s144 = sphi 0, %s142
      %s145 = sphi 0, %s144
      %s159 = sphi 0, %s145
      %s163 = sphi 0, %s163
      %s165 = sphi 0, %s163
      %s166 = sphi 0, %s165
      %s180 = sphi 0, %s166
      %s184 = sphi 0, %s184
      %s186 = sphi 0, %s184
      %s187 = sphi 0, %s186
      %s201 = sphi 0, %s187
      %s205 = sphi 0, %s205
      %s207 = sphi 0, %s205
      %s208 = sphi 0, %s207
      %s222 = sphi 0, %s208
      %s230 = sphi 0, %s232
      %s233 = sphi 0, %s230
      %s234 = sphi 0, %s233
      %s250 = sphi 0, %s234
    $region4: #{tpu_custom_call.1} parent=1 // loop_header_branch
      %27 = sbr.rel (%p25) target = $region8
    $region5: #{tpu_custom_call.1} parent=1 // loop_body
      %s29 = ssub.s32 %s24, 1
      %s30 = ssub.s32 %s24, 2
      %s37 = sadd.s32 1, %s32
      %p38 = scmp.ge.s32.totalorder %s37, 1
      %s39 = scalar_select %p38, 0, %s37
      %s40 = sadd.s32 1, %s31
      %s41 = scalar_select %p38, %s40, %s31
      %p42 = scmp.ge.s32.totalorder %s41, 2
      %s43 = scalar_select %p42, 0, %s41
      %s44 = ssub.s32 %s31, %s43
      %s45 = ssub.s32 %s32, %s39
      %s46 = sor.u32 %s44, %s45
      %p47 = scmp.eq.s32.totalorder %s46, 0
      %s49 = sadd.s32 %s48, 1
      %s50 = scalar_select %p47, %s48, %s49
      %p53 = pneg %p47
      %p54 = scmp.eq.s32.totalorder %s24, 1
      %p55 = por %p53, %p54
      %p56 = scmp.ne.s32.totalorder %s48, %s51
      %p57 = scmp.eq.s32.totalorder %s24, 0
      %p58 = por %p56, %p57
      %p59 = scmp.ne.s32.totalorder %s48, %s51
      %p60 = scmp.eq.s32.totalorder %s29, 1
      %p61 = por %p59, %p60
      %p62 = scmp.ne.s32.totalorder %s51, %s52
      %p63 = scmp.eq.s32.totalorder %s29, 0
      %p64 = por %p62, %p63
      %p65 = scmp.ne.s32.totalorder %s51, %s52
      %p66 = scmp.eq.s32.totalorder %s30, 1
      %p67 = por %p65, %p66
      %p69 = scmp.ne.s32.totalorder %s52, %s68
      %p70 = scmp.eq.s32.totalorder %s30, 0
      %p71 = por %p69, %p70
      %s72 = ssub.s32 %s31, %s43
      %s73 = ssub.s32 %s32, %s39
      %s74 = sor.u32 %s72, %s73
      %p75 = scmp.eq.s32.totalorder %s74, 0
      %s77 = sadd.s32 %s76, 1
      %s78 = scalar_select %p75, %s76, %s77
      %p81 = pneg %p75
      %p82 = scmp.eq.s32.totalorder %s24, 1
      %p83 = por %p81, %p82
      %p84 = scmp.ne.s32.totalorder %s76, %s79
      %p85 = scmp.eq.s32.totalorder %s24, 0
      %p86 = por %p84, %p85
      %p87 = scmp.ne.s32.totalorder %s76, %s79
      %p88 = scmp.eq.s32.totalorder %s29, 1
      %p89 = por %p87, %p88
      %p90 = scmp.ne.s32.totalorder %s79, %s80
      %p91 = scmp.eq.s32.totalorder %s29, 0
      %p92 = por %p90, %p91
      %p93 = scmp.ne.s32.totalorder %s79, %s80
      %p94 = scmp.eq.s32.totalorder %s30, 1
      %p95 = por %p93, %p94
      %p97 = scmp.ne.s32.totalorder %s80, %s96
      %p98 = scmp.eq.s32.totalorder %s30, 0
      %p99 = por %p97, %p98
      %s101 = sadd.s32 %s100, 1
      %p104 = scmp.eq.s32.totalorder %s24, 1
      %p105 = scmp.ne.s32.totalorder %s100, %s102
      %p106 = scmp.eq.s32.totalorder %s24, 0
      %p107 = por %p105, %p106
      %p108 = scmp.ne.s32.totalorder %s100, %s102
      %p109 = scmp.eq.s32.totalorder %s29, 1
      %p110 = por %p108, %p109
      %p111 = scmp.ne.s32.totalorder %s102, %s103
      %p112 = scmp.eq.s32.totalorder %s29, 0
      %p113 = por %p111, %p112
      %p114 = scmp.ne.s32.totalorder %s102, %s103
      %p115 = scmp.eq.s32.totalorder %s30, 1
      %p116 = por %p114, %p115
      %p118 = scmp.ne.s32.totalorder %s103, %s117
      %p119 = scmp.eq.s32.totalorder %s30, 0
      %p120 = por %p118, %p119
      %s122 = sadd.s32 %s121, 1
      %p125 = scmp.eq.s32.totalorder %s24, 1
      %p126 = scmp.ne.s32.totalorder %s121, %s123
      %p127 = scmp.eq.s32.totalorder %s24, 0
      %p128 = por %p126, %p127
      %p129 = scmp.ne.s32.totalorder %s121, %s123
      %p130 = scmp.eq.s32.totalorder %s29, 1
      %p131 = por %p129, %p130
      %p132 = scmp.ne.s32.totalorder %s123, %s124
      %p133 = scmp.eq.s32.totalorder %s29, 0
      %p134 = por %p132, %p133
      %p135 = scmp.ne.s32.totalorder %s123, %s124
      %p136 = scmp.eq.s32.totalorder %s30, 1
      %p137 = por %p135, %p136
      %p139 = scmp.ne.s32.totalorder %s124, %s138
      %p140 = scmp.eq.s32.totalorder %s30, 0
      %p141 = por %p139, %p140
      %s143 = sadd.s32 %s142, 1
      %p146 = scmp.eq.s32.totalorder %s24, 1
      %p147 = scmp.ne.s32.totalorder %s142, %s144
      %p148 = scmp.eq.s32.totalorder %s24, 0
      %p149 = por %p147, %p148
      %p150 = scmp.ne.s32.totalorder %s142, %s144
      %p151 = scmp.eq.s32.totalorder %s29, 1
      %p152 = por %p150, %p151
      %p153 = scmp.ne.s32.totalorder %s144, %s145
      %p154 = scmp.eq.s32.totalorder %s29, 0
      %p155 = por %p153, %p154
      %p156 = scmp.ne.s32.totalorder %s144, %s145
      %p157 = scmp.eq.s32.totalorder %s30, 1
      %p158 = por %p156, %p157
      %p160 = scmp.ne.s32.totalorder %s145, %s159
      %p161 = scmp.eq.s32.totalorder %s30, 0
      %p162 = por %p160, %p161
      %s164 = sadd.s32 %s163, 1
      %p167 = scmp.eq.s32.totalorder %s24, 1
      %p168 = scmp.ne.s32.totalorder %s163, %s165
      %p169 = scmp.eq.s32.totalorder %s24, 0
      %p170 = por %p168, %p169
      %p171 = scmp.ne.s32.totalorder %s163, %s165
      %p172 = scmp.eq.s32.totalorder %s29, 1
      %p173 = por %p171, %p172
      %p174 = scmp.ne.s32.totalorder %s165, %s166
      %p175 = scmp.eq.s32.totalorder %s29, 0
      %p176 = por %p174, %p175
      %p177 = scmp.ne.s32.totalorder %s165, %s166
      %p178 = scmp.eq.s32.totalorder %s30, 1
      %p179 = por %p177, %p178
      %p181 = scmp.ne.s32.totalorder %s166, %s180
      %p182 = scmp.eq.s32.totalorder %s30, 0
      %p183 = por %p181, %p182
      %s185 = sadd.s32 %s184, 1
      %p188 = scmp.eq.s32.totalorder %s24, 1
      %p189 = scmp.ne.s32.totalorder %s184, %s186
      %p190 = scmp.eq.s32.totalorder %s24, 0
      %p191 = por %p189, %p190
      %p192 = scmp.ne.s32.totalorder %s184, %s186
      %p193 = scmp.eq.s32.totalorder %s29, 1
      %p194 = por %p192, %p193
      %p195 = scmp.ne.s32.totalorder %s186, %s187
      %p196 = scmp.eq.s32.totalorder %s29, 0
      %p197 = por %p195, %p196
      %p198 = scmp.ne.s32.totalorder %s186, %s187
      %p199 = scmp.eq.s32.totalorder %s30, 1
      %p200 = por %p198, %p199
      %p202 = scmp.ne.s32.totalorder %s187, %s201
      %p203 = scmp.eq.s32.totalorder %s30, 0
      %p204 = por %p202, %p203
      %s206 = sadd.s32 %s205, 1
      %p209 = scmp.eq.s32.totalorder %s24, 1
      %p210 = scmp.ne.s32.totalorder %s205, %s207
      %p211 = scmp.eq.s32.totalorder %s24, 0
      %p212 = por %p210, %p211
      %p213 = scmp.ne.s32.totalorder %s205, %s207
      %p214 = scmp.eq.s32.totalorder %s29, 1
      %p215 = por %p213, %p214
      %p216 = scmp.ne.s32.totalorder %s207, %s208
      %p217 = scmp.eq.s32.totalorder %s29, 0
      %p218 = por %p216, %p217
      %p219 = scmp.ne.s32.totalorder %s207, %s208
      %p220 = scmp.eq.s32.totalorder %s30, 1
      %p221 = por %p219, %p220
      %p223 = scmp.ne.s32.totalorder %s208, %s222
      %p224 = scmp.eq.s32.totalorder %s30, 0
      %p225 = por %p223, %p224
      %s226 = ssub.s32 %s31, %s43
      %s227 = ssub.s32 %s32, %s39
      %s228 = sor.u32 %s226, %s227
      %p229 = scmp.eq.s32.totalorder %s228, 0
      %s231 = sadd.s32 %s230, 1
      %s232 = scalar_select %p229, %s230, %s231
      %p235 = pneg %p229
      %p236 = scmp.eq.s32.totalorder %s24, 1
      %p237 = por %p235, %p236
      %p238 = scmp.ne.s32.totalorder %s230, %s233
      %p239 = scmp.eq.s32.totalorder %s24, 0
      %p240 = por %p238, %p239
      %p241 = scmp.ne.s32.totalorder %s230, %s233
      %p242 = scmp.eq.s32.totalorder %s29, 1
      %p243 = por %p241, %p242
      %p244 = scmp.ne.s32.totalorder %s233, %s234
      %p245 = scmp.eq.s32.totalorder %s29, 0
      %p246 = por %p244, %p245
      %p247 = scmp.ne.s32.totalorder %s233, %s234
      %p248 = scmp.eq.s32.totalorder %s30, 1
      %p249 = por %p247, %p248
      %p251 = scmp.ne.s32.totalorder %s234, %s250
      %p252 = scmp.eq.s32.totalorder %s30, 0
      %p253 = por %p251, %p252
      %p254 = scmp.le.s32.totalorder 1, %s24
      %p255 = scmp.lt.s32.totalorder %s24, 3
      %p256 = pnand %p254, %p255
      %p257 = pneg %p256
      // Predicated region
      $region9: #{tpu_custom_call.1} parent=5 // pred_check
        _
      $region10: #{tpu_custom_call.1} parent=5 // pred_check_branch
        %259 = sbr.rel (%p256) target = $region12
      $region11: #{tpu_custom_call.1} parent=5 // pred_region
        %s260 = ssub.s32 %s24, 1
        // Predicated region
        $region13: #{tpu_custom_call.1} parent=11 // pred_check
          %p261 = pneg %p113
        $region14: #{tpu_custom_call.1} parent=11 // pred_check_branch
          %263 = sbr.rel (%p261) target = $region16
        $region15: #{tpu_custom_call.1} parent=11 // pred_region
          %265 = vsyncadd [#allocation6], 0
          %s266 = sshll.u32 %s2, 4
          %s267 = int_to_ptr.hbm [resolvable:$true] %s266
          %s268 = sshll.u32 [#allocation7], 4
          %s269 = int_to_ptr.vmem [resolvable:$true] %s268
          %274 = dma.hbm_to_vmem [thread:$0]  %s267, 1280, %s269, [#allocation6], 320, 320, 20
        $region16: #{tpu_custom_call.1} parent=11 // pred_fallthru
          _
        // Predicated region
        $region17: #{tpu_custom_call.1} parent=11 // pred_check
          %p275 = pneg %p134
        $region18: #{tpu_custom_call.1} parent=11 // pred_check_branch
          %277 = sbr.rel (%p275) target = $region20
        $region19: #{tpu_custom_call.1} parent=11 // pred_region
          %279 = vsyncadd [#allocation9], 0
          %s280 = sshll.u32 %s3, 4
          %s281 = int_to_ptr.hbm [resolvable:$true] %s280
          %s282 = sshll.u32 [#allocation8], 4
          %s283 = int_to_ptr.vmem [resolvable:$true] %s282
          %288 = dma.hbm_to_vmem [thread:$0]  %s281, 1280, %s283, [#allocation9], 320, 320, 20
        $region20: #{tpu_custom_call.1} parent=11 // pred_fallthru
          _
        // Predicated region
        $region21: #{tpu_custom_call.1} parent=11 // pred_check
          %p289 = pneg %p155
        $region22: #{tpu_custom_call.1} parent=11 // pred_check_branch
          %291 = sbr.rel (%p289) target = $region24
        $region23: #{tpu_custom_call.1} parent=11 // pred_region
          _
        $region24: #{tpu_custom_call.1} parent=11 // pred_fallthru
          _
        // Predicated region
        $region25: #{tpu_custom_call.1} parent=11 // pred_check
          %p292 = pneg %p176
        $region26: #{tpu_custom_call.1} parent=11 // pred_check_branch
          %294 = sbr.rel (%p292) target = $region28
        $region27: #{tpu_custom_call.1} parent=11 // pred_region
          _
        $region28: #{tpu_custom_call.1} parent=11 // pred_fallthru
          _
        // Predicated region
        $region29: #{tpu_custom_call.1} parent=11 // pred_check
          %p295 = pneg %p197
        $region30: #{tpu_custom_call.1} parent=11 // pred_check_branch
          %297 = sbr.rel (%p295) target = $region32
        $region31: #{tpu_custom_call.1} parent=11 // pred_region
          _
        $region32: #{tpu_custom_call.1} parent=11 // pred_fallthru
          _
        // Predicated region
        $region33: #{tpu_custom_call.1} parent=11 // pred_check
          %p298 = pneg %p218
        $region34: #{tpu_custom_call.1} parent=11 // pred_check_branch
          %300 = sbr.rel (%p298) target = $region36
        $region35: #{tpu_custom_call.1} parent=11 // pred_region
          _
        $region36: #{tpu_custom_call.1} parent=11 // pred_fallthru
          _
      $region12: #{tpu_custom_call.1} parent=5 // pred_fallthru
        _
      %p301 = scmp.lt.s32.totalorder %s24, 2
      // Predicated region
      $region37: #{tpu_custom_call.1} parent=5 // pred_check
        %p302 = pneg %p301
      $region38: #{tpu_custom_call.1} parent=5 // pred_check_branch
        %304 = sbr.rel (%p302) target = $region40
      $region39: #{tpu_custom_call.1} parent=5 // pred_region
        // Predicated region
        $region41: #{tpu_custom_call.1} parent=39 // pred_check
          %p305 = pneg %p58
        $region42: #{tpu_custom_call.1} parent=39 // pred_check_branch
          %307 = sbr.rel (%p305) target = $region44
        $region43: #{tpu_custom_call.1} parent=39 // pred_region
          %s308 = sand.u32 %s48, 1
          %s309 = scalar_lea.sflag [#allocation3], %s308
          %s310 = sand.u32 %s48, 1
          %s311 = scalar_lea.vmem [#allocation2], %s310
          %313 = vsyncadd %s309, 0
          %s314 = sadd.s32 %s32, %s31
          %s315 = scalar_lea.hbm %s0, %s314
          %s317 = sshll.u32 %s315, 4
          %s318 = int_to_ptr.hbm [resolvable:$true] %s317
          %s319 = sshll.u32 %s311, 4
          %s320 = int_to_ptr.vmem [resolvable:$true] %s319
          %322 = dma.hbm_to_vmem [thread:$0]  %s318, 16, %s320, %s309
        $region44: #{tpu_custom_call.1} parent=39 // pred_fallthru
          _
        // Predicated region
        $region45: #{tpu_custom_call.1} parent=39 // pred_check
          %p323 = pneg %p86
        $region46: #{tpu_custom_call.1} parent=39 // pred_check_branch
          %325 = sbr.rel (%p323) target = $region48
        $region47: #{tpu_custom_call.1} parent=39 // pred_region
          %s326 = sand.u32 %s24, 1
          %s327 = scalar_lea.sflag [#allocation6], %s326
          %s328 = sand.u32 %s76, 1
          %s329 = scalar_lea.vmem [#allocation5], %s328
          %331 = vsyncadd %s327, 0
          %s332 = sadd.s32 %s32, %s31
          %s333 = scalar_lea.hbm %s1, %s332
          %s335 = sshll.u32 %s333, 4
          %s336 = int_to_ptr.hbm [resolvable:$true] %s335
          %s337 = sshll.u32 %s329, 4
          %s338 = int_to_ptr.vmem [resolvable:$true] %s337
          %340 = dma.hbm_to_vmem [thread:$0]  %s336, 16, %s338, %s327
        $region48: #{tpu_custom_call.1} parent=39 // pred_fallthru
          _
      $region40: #{tpu_custom_call.1} parent=5 // pred_fallthru
        _
      %p341 = scmp.le.s32.totalorder 1, %s24
      %p342 = scmp.lt.s32.totalorder %s24, 3
      %p343 = pnand %p341, %p342
      %p344 = pneg %p343
      // Predicated region
      $region49: #{tpu_custom_call.1} parent=5 // pred_check
        _
      $region50: #{tpu_custom_call.1} parent=5 // pred_check_branch
        %346 = sbr.rel (%p343) target = $region52
      $region51: #{tpu_custom_call.1} parent=5 // pred_region
        %s347 = ssub.s32 %s24, 1
        %s348 = sand.u32 %s51, 1
        %s349 = scalar_lea.sflag [#allocation3], %s348
        %s350 = sand.u32 %s51, 1
        %s351 = scalar_lea.vmem [#allocation2], %s350
        // Predicated region
        $region53: #{tpu_custom_call.1} parent=51 // pred_check
          %p352 = pneg %p64
        $region54: #{tpu_custom_call.1} parent=51 // pred_check_branch
          %354 = sbr.rel (%p352) target = $region56
        $region55: #{tpu_custom_call.1} parent=51 // pred_region
          %356 = dma.done %s349, 16
        $region56: #{tpu_custom_call.1} parent=51 // pred_fallthru
          _
        %s357 = sand.u32 %s29, 1
        %s358 = scalar_lea.sflag [#allocation6], %s357
        %s359 = sand.u32 %s79, 1
        %s360 = scalar_lea.vmem [#allocation5], %s359
        // Predicated region
        $region57: #{tpu_custom_call.1} parent=51 // pred_check
          %p361 = pneg %p92
        $region58: #{tpu_custom_call.1} parent=51 // pred_check_branch
          %363 = sbr.rel (%p361) target = $region60
        $region59: #{tpu_custom_call.1} parent=51 // pred_region
          %365 = dma.done %s358, 16
        $region60: #{tpu_custom_call.1} parent=51 // pred_fallthru
          _
        // Predicated region
        $region61: #{tpu_custom_call.1} parent=51 // pred_check
          %p366 = pneg %p113
        $region62: #{tpu_custom_call.1} parent=51 // pred_check_branch
          %368 = sbr.rel (%p366) target = $region64
        $region63: #{tpu_custom_call.1} parent=51 // pred_region
          %370 = dma.done [#allocation6], 1280
        $region64: #{tpu_custom_call.1} parent=51 // pred_fallthru
          _
        // Predicated region
        $region65: #{tpu_custom_call.1} parent=51 // pred_check
          %p371 = pneg %p134
        $region66: #{tpu_custom_call.1} parent=51 // pred_check_branch
          %373 = sbr.rel (%p371) target = $region68
        $region67: #{tpu_custom_call.1} parent=51 // pred_region
          %375 = dma.done [#allocation9], 1280
        $region68: #{tpu_custom_call.1} parent=51 // pred_fallthru
          _
        %s376 = sand.u32 %s51, 1
        %s377 = scalar_lea.sflag [#allocation3], %s376
        %s378 = sand.u32 %s51, 1
        %s379 = scalar_lea.vmem [#allocation2], %s378
        %p380 = pneg %p64
        %p381 = pneg %p61
        %s382 = sand.u32 %s29, 1
        %s383 = scalar_lea.sflag [#allocation6], %s382
        %s384 = sand.u32 %s79, 1
        %s385 = scalar_lea.vmem [#allocation5], %s384
        %p386 = pneg %p92
        %p387 = pneg %p89
        %p388 = pneg %p113
        %p389 = pneg %p110
        %p390 = pneg %p134
        %p391 = pneg %p131
        %p392 = pneg %p155
        %p393 = pneg %p152
        %p394 = pneg %p176
        %p395 = pneg %p173
        %p396 = pneg %p197
        %p397 = pneg %p194
        %p398 = pneg %p218
        %p399 = pneg %p215
        %p400 = pneg %p246
        %p401 = pneg %p243
        %s402 = sand.u32 %s233, 1
        %s403 = scalar_lea.sflag [#allocation4], %s402
        %s404 = sand.u32 %s233, 1
        %s405 = smul.addr %s404, 32
        %s406 = scalar_lea.vmem [#allocation10], %s405
        %v407 = vld [vmem:[%s351] sm:$0x1]
        %v408 = vand.u32 %v407, 1023
        %v409 = vshra.s32 %v407, 10
        %v410 = vlaneseq
        %v411 = vshrl.u32 %v410, 7
        %v412 = vadd.s32 %v411, 8
        %v413 = vadd.s32 %v411, 16
        %v414 = vadd.s32 %v411, 24
        %v415 = vadd.s32 %v411, 32
        %v416 = vadd.s32 %v411, 40
        %v417 = vadd.s32 %v411, 48
        %v418 = vadd.s32 %v411, 56
        %v419 = vadd.s32 %v411, 64
        %v420 = vadd.s32 %v411, 72
        %v421 = vadd.s32 %v411, 80
        %v422 = vadd.s32 %v411, 88
        %v423 = vadd.s32 %v411, 96
        %v424 = vadd.s32 %v411, 104
        %v425 = vadd.s32 %v411, 112
        %v426 = vadd.s32 %v411, 120
        %v427 = vadd.s32 %v411, 128
        %v428 = vadd.s32 %v411, 136
        %v429 = vadd.s32 %v411, 144
        %v430 = vadd.s32 %v411, 152
        %v431 = vadd.s32 %v411, 160
        %v432 = vadd.s32 %v411, 168
        %v433 = vadd.s32 %v411, 176
        %v434 = vadd.s32 %v411, 184
        %v435 = vadd.s32 %v411, 192
        %v436 = vadd.s32 %v411, 200
        %v437 = vadd.s32 %v411, 208
        %v438 = vadd.s32 %v411, 216
        %v439 = vadd.s32 %v411, 224
        %v440 = vadd.s32 %v411, 232
        %v441 = vadd.s32 %v411, 240
        %v442 = vadd.s32 %v411, 248
        %v443 = vadd.s32 %v411, 256
        %v444 = vadd.s32 %v411, 264
        %v445 = vadd.s32 %v411, 272
        %v446 = vadd.s32 %v411, 280
        %v447 = vadd.s32 %v411, 288
        %v448 = vadd.s32 %v411, 296
        %v449 = vadd.s32 %v411, 304
        %v450 = vadd.s32 %v411, 312
        %v451 = vadd.s32 %v411, 320
        %v452 = vadd.s32 %v411, 328
        %v453 = vadd.s32 %v411, 336
        %v454 = vadd.s32 %v411, 344
        %v455 = vadd.s32 %v411, 352
        %v456 = vadd.s32 %v411, 360
        %v457 = vadd.s32 %v411, 368
        %v458 = vadd.s32 %v411, 376
        %v459 = vadd.s32 %v411, 384
        %v460 = vadd.s32 %v411, 392
        %v461 = vadd.s32 %v411, 400
        %v462 = vadd.s32 %v411, 408
        %v463 = vadd.s32 %v411, 416
        %v464 = vadd.s32 %v411, 424
        %v465 = vadd.s32 %v411, 432
        %v466 = vadd.s32 %v411, 440
        %v467 = vadd.s32 %v411, 448
        %v468 = vadd.s32 %v411, 456
        %v469 = vadd.s32 %v411, 464
        %v470 = vadd.s32 %v411, 472
        %v471 = vadd.s32 %v411, 480
        %v472 = vadd.s32 %v411, 488
        %v473 = vadd.s32 %v411, 496
        %v474 = vadd.s32 %v411, 504
        %v475 = vadd.s32 %v411, 512
        %v476 = vadd.s32 %v411, 520
        %v477 = vadd.s32 %v411, 528
        %v478 = vadd.s32 %v411, 536
        %v479 = vadd.s32 %v411, 544
        %v480 = vadd.s32 %v411, 552
        %v481 = vadd.s32 %v411, 560
        %v482 = vadd.s32 %v411, 568
        %v483 = vadd.s32 %v411, 576
        %v484 = vadd.s32 %v411, 584
        %v485 = vadd.s32 %v411, 592
        %v486 = vadd.s32 %v411, 600
        %v487 = vadd.s32 %v411, 608
        %v488 = vadd.s32 %v411, 616
        %v489 = vadd.s32 %v411, 624
        %v490 = vadd.s32 %v411, 632
        %v491 = vperm.slane %v409, 0
        %vm492 = vcmp.eq.s32.totalorder %v411, %v491
        %vm493 = vcmp.eq.s32.totalorder %v412, %v491
        %vm494 = vcmp.eq.s32.totalorder %v413, %v491
        %vm495 = vcmp.eq.s32.totalorder %v414, %v491
        %vm496 = vcmp.eq.s32.totalorder %v415, %v491
        %vm497 = vcmp.eq.s32.totalorder %v416, %v491
        %vm498 = vcmp.eq.s32.totalorder %v417, %v491
        %vm499 = vcmp.eq.s32.totalorder %v418, %v491
        %vm500 = vcmp.eq.s32.totalorder %v419, %v491
        %vm501 = vcmp.eq.s32.totalorder %v420, %v491
        %vm502 = vcmp.eq.s32.totalorder %v421, %v491
        %vm503 = vcmp.eq.s32.totalorder %v422, %v491
        %vm504 = vcmp.eq.s32.totalorder %v423, %v491
        %vm505 = vcmp.eq.s32.totalorder %v424, %v491
        %vm506 = vcmp.eq.s32.totalorder %v425, %v491
        %vm507 = vcmp.eq.s32.totalorder %v426, %v491
        %vm508 = vcmp.eq.s32.totalorder %v427, %v491
        %vm509 = vcmp.eq.s32.totalorder %v428, %v491
        %vm510 = vcmp.eq.s32.totalorder %v429, %v491
        %vm511 = vcmp.eq.s32.totalorder %v430, %v491
        %vm512 = vcmp.eq.s32.totalorder %v431, %v491
        %vm513 = vcmp.eq.s32.totalorder %v432, %v491
        %vm514 = vcmp.eq.s32.totalorder %v433, %v491
        %vm515 = vcmp.eq.s32.totalorder %v434, %v491
        %vm516 = vcmp.eq.s32.totalorder %v435, %v491
        %vm517 = vcmp.eq.s32.totalorder %v436, %v491
        %vm518 = vcmp.eq.s32.totalorder %v437, %v491
        %vm519 = vcmp.eq.s32.totalorder %v438, %v491
        %vm520 = vcmp.eq.s32.totalorder %v439, %v491
        %vm521 = vcmp.eq.s32.totalorder %v440, %v491
        %vm522 = vcmp.eq.s32.totalorder %v441, %v491
        %vm523 = vcmp.eq.s32.totalorder %v442, %v491
        %vm524 = vcmp.eq.s32.totalorder %v443, %v491
        %vm525 = vcmp.eq.s32.totalorder %v444, %v491
        %vm526 = vcmp.eq.s32.totalorder %v445, %v491
        %vm527 = vcmp.eq.s32.totalorder %v446, %v491
        %vm528 = vcmp.eq.s32.totalorder %v447, %v491
        %vm529 = vcmp.eq.s32.totalorder %v448, %v491
        %vm530 = vcmp.eq.s32.totalorder %v449, %v491
        %vm531 = vcmp.eq.s32.totalorder %v450, %v491
        %vm532 = vcmp.eq.s32.totalorder %v451, %v491
        %vm533 = vcmp.eq.s32.totalorder %v452, %v491
        %vm534 = vcmp.eq.s32.totalorder %v453, %v491
        %vm535 = vcmp.eq.s32.totalorder %v454, %v491
        %vm536 = vcmp.eq.s32.totalorder %v455, %v491
        %vm537 = vcmp.eq.s32.totalorder %v456, %v491
        %vm538 = vcmp.eq.s32.totalorder %v457, %v491
        %vm539 = vcmp.eq.s32.totalorder %v458, %v491
        %vm540 = vcmp.eq.s32.totalorder %v459, %v491
        %vm541 = vcmp.eq.s32.totalorder %v460, %v491
        %vm542 = vcmp.eq.s32.totalorder %v461, %v491
        %vm543 = vcmp.eq.s32.totalorder %v462, %v491
        %vm544 = vcmp.eq.s32.totalorder %v463, %v491
        %vm545 = vcmp.eq.s32.totalorder %v464, %v491
        %vm546 = vcmp.eq.s32.totalorder %v465, %v491
        %vm547 = vcmp.eq.s32.totalorder %v466, %v491
        %vm548 = vcmp.eq.s32.totalorder %v467, %v491
        %vm549 = vcmp.eq.s32.totalorder %v468, %v491
        %vm550 = vcmp.eq.s32.totalorder %v469, %v491
        %vm551 = vcmp.eq.s32.totalorder %v470, %v491
        %vm552 = vcmp.eq.s32.totalorder %v471, %v491
        %vm553 = vcmp.eq.s32.totalorder %v472, %v491
        %vm554 = vcmp.eq.s32.totalorder %v473, %v491
        %vm555 = vcmp.eq.s32.totalorder %v474, %v491
        %vm556 = vcmp.eq.s32.totalorder %v475, %v491
        %vm557 = vcmp.eq.s32.totalorder %v476, %v491
        %vm558 = vcmp.eq.s32.totalorder %v477, %v491
        %vm559 = vcmp.eq.s32.totalorder %v478, %v491
        %vm560 = vcmp.eq.s32.totalorder %v479, %v491
        %vm561 = vcmp.eq.s32.totalorder %v480, %v491
        %vm562 = vcmp.eq.s32.totalorder %v481, %v491
        %vm563 = vcmp.eq.s32.totalorder %v482, %v491
        %vm564 = vcmp.eq.s32.totalorder %v483, %v491
        %vm565 = vcmp.eq.s32.totalorder %v484, %v491
        %vm566 = vcmp.eq.s32.totalorder %v485, %v491
        %vm567 = vcmp.eq.s32.totalorder %v486, %v491
        %vm568 = vcmp.eq.s32.totalorder %v487, %v491
        %vm569 = vcmp.eq.s32.totalorder %v488, %v491
        %vm570 = vcmp.eq.s32.totalorder %v489, %v491
        %vm571 = vcmp.eq.s32.totalorder %v490, %v491
        %v572 = vperm.slane %v408, 0
        %vm573 = vcmp.eq.s32.totalorder %v411, %v572
        %vm574 = vcmp.eq.s32.totalorder %v412, %v572
        %vm575 = vcmp.eq.s32.totalorder %v413, %v572
        %vm576 = vcmp.eq.s32.totalorder %v414, %v572
        %vm577 = vcmp.eq.s32.totalorder %v415, %v572
        %vm578 = vcmp.eq.s32.totalorder %v416, %v572
        %vm579 = vcmp.eq.s32.totalorder %v417, %v572
        %vm580 = vcmp.eq.s32.totalorder %v418, %v572
        %vm581 = vcmp.eq.s32.totalorder %v419, %v572
        %vm582 = vcmp.eq.s32.totalorder %v420, %v572
        %vm583 = vcmp.eq.s32.totalorder %v421, %v572
        %vm584 = vcmp.eq.s32.totalorder %v422, %v572
        %vm585 = vcmp.eq.s32.totalorder %v423, %v572
        %vm586 = vcmp.eq.s32.totalorder %v424, %v572
        %vm587 = vcmp.eq.s32.totalorder %v425, %v572
        %vm588 = vcmp.eq.s32.totalorder %v426, %v572
        %vm589 = vcmp.eq.s32.totalorder %v427, %v572
        %vm590 = vcmp.eq.s32.totalorder %v428, %v572
        %vm591 = vcmp.eq.s32.totalorder %v429, %v572
        %vm592 = vcmp.eq.s32.totalorder %v430, %v572
        %vm593 = vcmp.eq.s32.totalorder %v431, %v572
        %vm594 = vcmp.eq.s32.totalorder %v432, %v572
        %vm595 = vcmp.eq.s32.totalorder %v433, %v572
        %vm596 = vcmp.eq.s32.totalorder %v434, %v572
        %vm597 = vcmp.eq.s32.totalorder %v435, %v572
        %vm598 = vcmp.eq.s32.totalorder %v436, %v572
        %vm599 = vcmp.eq.s32.totalorder %v437, %v572
        %vm600 = vcmp.eq.s32.totalorder %v438, %v572
        %vm601 = vcmp.eq.s32.totalorder %v439, %v572
        %vm602 = vcmp.eq.s32.totalorder %v440, %v572
        %vm603 = vcmp.eq.s32.totalorder %v441, %v572
        %vm604 = vcmp.eq.s32.totalorder %v442, %v572
        %vm605 = vcmp.eq.s32.totalorder %v443, %v572
        %vm606 = vcmp.eq.s32.totalorder %v444, %v572
        %vm607 = vcmp.eq.s32.totalorder %v445, %v572
        %vm608 = vcmp.eq.s32.totalorder %v446, %v572
        %vm609 = vcmp.eq.s32.totalorder %v447, %v572
        %vm610 = vcmp.eq.s32.totalorder %v448, %v572
        %vm611 = vcmp.eq.s32.totalorder %v449, %v572
        %vm612 = vcmp.eq.s32.totalorder %v450, %v572
        %vm613 = vcmp.eq.s32.totalorder %v451, %v572
        %vm614 = vcmp.eq.s32.totalorder %v452, %v572
        %vm615 = vcmp.eq.s32.totalorder %v453, %v572
        %vm616 = vcmp.eq.s32.totalorder %v454, %v572
        %vm617 = vcmp.eq.s32.totalorder %v455, %v572
        %vm618 = vcmp.eq.s32.totalorder %v456, %v572
        %vm619 = vcmp.eq.s32.totalorder %v457, %v572
        %vm620 = vcmp.eq.s32.totalorder %v458, %v572
        %vm621 = vcmp.eq.s32.totalorder %v459, %v572
        %vm622 = vcmp.eq.s32.totalorder %v460, %v572
        %vm623 = vcmp.eq.s32.totalorder %v461, %v572
        %vm624 = vcmp.eq.s32.totalorder %v462, %v572
        %vm625 = vcmp.eq.s32.totalorder %v463, %v572
        %vm626 = vcmp.eq.s32.totalorder %v464, %v572
        %vm627 = vcmp.eq.s32.totalorder %v465, %v572
        %vm628 = vcmp.eq.s32.totalorder %v466, %v572
        %vm629 = vcmp.eq.s32.totalorder %v467, %v572
        %vm630 = vcmp.eq.s32.totalorder %v468, %v572
        %vm631 = vcmp.eq.s32.totalorder %v469, %v572
        %vm632 = vcmp.eq.s32.totalorder %v470, %v572
        %vm633 = vcmp.eq.s32.totalorder %v471, %v572
        %vm634 = vcmp.eq.s32.totalorder %v472, %v572
        %vm635 = vcmp.eq.s32.totalorder %v473, %v572
        %vm636 = vcmp.eq.s32.totalorder %v474, %v572
        %vm637 = vcmp.eq.s32.totalorder %v475, %v572
        %vm638 = vcmp.eq.s32.totalorder %v476, %v572
        %vm639 = vcmp.eq.s32.totalorder %v477, %v572
        %vm640 = vcmp.eq.s32.totalorder %v478, %v572
        %vm641 = vcmp.eq.s32.totalorder %v479, %v572
        %vm642 = vcmp.eq.s32.totalorder %v480, %v572
        %vm643 = vcmp.eq.s32.totalorder %v481, %v572
        %vm644 = vcmp.eq.s32.totalorder %v482, %v572
        %vm645 = vcmp.eq.s32.totalorder %v483, %v572
        %vm646 = vcmp.eq.s32.totalorder %v484, %v572
        %vm647 = vcmp.eq.s32.totalorder %v485, %v572
        %vm648 = vcmp.eq.s32.totalorder %v486, %v572
        %vm649 = vcmp.eq.s32.totalorder %v487, %v572
        %vm650 = vcmp.eq.s32.totalorder %v488, %v572
        %vm651 = vcmp.eq.s32.totalorder %v489, %v572
        %vm652 = vcmp.eq.s32.totalorder %v490, %v572
        %vm653 = vmor %vm492, %vm573
        %vm654 = vmor %vm493, %vm574
        %vm655 = vmor %vm494, %vm575
        %vm656 = vmor %vm495, %vm576
        %vm657 = vmor %vm496, %vm577
        %vm658 = vmor %vm497, %vm578
        %vm659 = vmor %vm498, %vm579
        %vm660 = vmor %vm499, %vm580
        %vm661 = vmor %vm500, %vm581
        %vm662 = vmor %vm501, %vm582
        %vm663 = vmor %vm502, %vm583
        %vm664 = vmor %vm503, %vm584
        %vm665 = vmor %vm504, %vm585
        %vm666 = vmor %vm505, %vm586
        %vm667 = vmor %vm506, %vm587
        %vm668 = vmor %vm507, %vm588
        %vm669 = vmor %vm508, %vm589
        %vm670 = vmor %vm509, %vm590
        %vm671 = vmor %vm510, %vm591
        %vm672 = vmor %vm511, %vm592
        %vm673 = vmor %vm512, %vm593
        %vm674 = vmor %vm513, %vm594
        %vm675 = vmor %vm514, %vm595
        %vm676 = vmor %vm515, %vm596
        %vm677 = vmor %vm516, %vm597
        %vm678 = vmor %vm517, %vm598
        %vm679 = vmor %vm518, %vm599
        %vm680 = vmor %vm519, %vm600
        %vm681 = vmor %vm520, %vm601
        %vm682 = vmor %vm521, %vm602
        %vm683 = vmor %vm522, %vm603
        %vm684 = vmor %vm523, %vm604
        %vm685 = vmor %vm524, %vm605
        %vm686 = vmor %vm525, %vm606
        %vm687 = vmor %vm526, %vm607
        %vm688 = vmor %vm527, %vm608
        %vm689 = vmor %vm528, %vm609
        %vm690 = vmor %vm529, %vm610
        %vm691 = vmor %vm530, %vm611
        %vm692 = vmor %vm531, %vm612
        %vm693 = vmor %vm532, %vm613
        %vm694 = vmor %vm533, %vm614
        %vm695 = vmor %vm534, %vm615
        %vm696 = vmor %vm535, %vm616
        %vm697 = vmor %vm536, %vm617
        %vm698 = vmor %vm537, %vm618
        %vm699 = vmor %vm538, %vm619
        %vm700 = vmor %vm539, %vm620
        %vm701 = vmor %vm540, %vm621
        %vm702 = vmor %vm541, %vm622
        %vm703 = vmor %vm542, %vm623
        %vm704 = vmor %vm543, %vm624
        %vm705 = vmor %vm544, %vm625
        %vm706 = vmor %vm545, %vm626
        %vm707 = vmor %vm546, %vm627
        %vm708 = vmor %vm547, %vm628
        %vm709 = vmor %vm548, %vm629
        %vm710 = vmor %vm549, %vm630
        %vm711 = vmor %vm550, %vm631
        %vm712 = vmor %vm551, %vm632
        %vm713 = vmor %vm552, %vm633
        %vm714 = vmor %vm553, %vm634
        %vm715 = vmor %vm554, %vm635
        %vm716 = vmor %vm555, %vm636
        %vm717 = vmor %vm556, %vm637
        %vm718 = vmor %vm557, %vm638
        %vm719 = vmor %vm558, %vm639
        %vm720 = vmor %vm559, %vm640
        %vm721 = vmor %vm560, %vm641
        %vm722 = vmor %vm561, %vm642
        %vm723 = vmor %vm562, %vm643
        %vm724 = vmor %vm563, %vm644
        %vm725 = vmor %vm564, %vm645
        %vm726 = vmor %vm565, %vm646
        %vm727 = vmor %vm566, %vm647
        %vm728 = vmor %vm567, %vm648
        %vm729 = vmor %vm568, %vm649
        %vm730 = vmor %vm569, %vm650
        %vm731 = vmor %vm570, %vm651
        %vm732 = vmor %vm571, %vm652
        %v733 = vsel %vm653, 1, 0
        %v734 = vsel %vm654, 1, 0
        %v735 = vsel %vm655, 1, 0
        %v736 = vsel %vm656, 1, 0
        %v737 = vsel %vm657, 1, 0
        %v738 = vsel %vm658, 1, 0
        %v739 = vsel %vm659, 1, 0
        %v740 = vsel %vm660, 1, 0
        %v741 = vsel %vm661, 1, 0
        %v742 = vsel %vm662, 1, 0
        %v743 = vsel %vm663, 1, 0
        %v744 = vsel %vm664, 1, 0
        %v745 = vsel %vm665, 1, 0
        %v746 = vsel %vm666, 1, 0
        %v747 = vsel %vm667, 1, 0
        %v748 = vsel %vm668, 1, 0
        %v749 = vsel %vm669, 1, 0
        %v750 = vsel %vm670, 1, 0
        %v751 = vsel %vm671, 1, 0
        %v752 = vsel %vm672, 1, 0
        %v753 = vsel %vm673, 1, 0
        %v754 = vsel %vm674, 1, 0
        %v755 = vsel %vm675, 1, 0
        %v756 = vsel %vm676, 1, 0
        %v757 = vsel %vm677, 1, 0
        %v758 = vsel %vm678, 1, 0
        %v759 = vsel %vm679, 1, 0
        %v760 = vsel %vm680, 1, 0
        %v761 = vsel %vm681, 1, 0
        %v762 = vsel %vm682, 1, 0
        %v763 = vsel %vm683, 1, 0
        %v764 = vsel %vm684, 1, 0
        %v765 = vsel %vm685, 1, 0
        %v766 = vsel %vm686, 1, 0
        %v767 = vsel %vm687, 1, 0
        %v768 = vsel %vm688, 1, 0
        %v769 = vsel %vm689, 1, 0
        %v770 = vsel %vm690, 1, 0
        %v771 = vsel %vm691, 1, 0
        %v772 = vsel %vm692, 1, 0
        %v773 = vsel %vm693, 1, 0
        %v774 = vsel %vm694, 1, 0
        %v775 = vsel %vm695, 1, 0
        %v776 = vsel %vm696, 1, 0
        %v777 = vsel %vm697, 1, 0
        %v778 = vsel %vm698, 1, 0
        %v779 = vsel %vm699, 1, 0
        %v780 = vsel %vm700, 1, 0
        %v781 = vsel %vm701, 1, 0
        %v782 = vsel %vm702, 1, 0
        %v783 = vsel %vm703, 1, 0
        %v784 = vsel %vm704, 1, 0
        %v785 = vsel %vm705, 1, 0
        %v786 = vsel %vm706, 1, 0
        %v787 = vsel %vm707, 1, 0
        %v788 = vsel %vm708, 1, 0
        %v789 = vsel %vm709, 1, 0
        %v790 = vsel %vm710, 1, 0
        %v791 = vsel %vm711, 1, 0
        %v792 = vsel %vm712, 1, 0
        %v793 = vsel %vm713, 1, 0
        %v794 = vsel %vm714, 1, 0
        %v795 = vsel %vm715, 1, 0
        %v796 = vsel %vm716, 1, 0
        %v797 = vsel %vm717, 1, 0
        %v798 = vsel %vm718, 1, 0
        %v799 = vsel %vm719, 1, 0
        %v800 = vsel %vm720, 1, 0
        %v801 = vsel %vm721, 1, 0
        %v802 = vsel %vm722, 1, 0
        %v803 = vsel %vm723, 1, 0
        %v804 = vsel %vm724, 1, 0
        %v805 = vsel %vm725, 1, 0
        %v806 = vsel %vm726, 1, 0
        %v807 = vsel %vm727, 1, 0
        %v808 = vsel %vm728, 1, 0
        %v809 = vsel %vm729, 1, 0
        %v810 = vsel %vm730, 1, 0
        %v811 = vsel %vm731, 1, 0
        %v812 = vsel %vm732, 1, 0
        %v813 = vcvt.s32.f32 %v733
        %v814 = vcvt.s32.f32 %v734
        %v815 = vcvt.s32.f32 %v735
        %v816 = vcvt.s32.f32 %v736
        %v817 = vcvt.s32.f32 %v737
        %v818 = vcvt.s32.f32 %v738
        %v819 = vcvt.s32.f32 %v739
        %v820 = vcvt.s32.f32 %v740
        %v821 = vcvt.s32.f32 %v741
        %v822 = vcvt.s32.f32 %v742
        %v823 = vcvt.s32.f32 %v743
        %v824 = vcvt.s32.f32 %v744
        %v825 = vcvt.s32.f32 %v745
        %v826 = vcvt.s32.f32 %v746
        %v827 = vcvt.s32.f32 %v747
        %v828 = vcvt.s32.f32 %v748
        %v829 = vcvt.s32.f32 %v749
        %v830 = vcvt.s32.f32 %v750
        %v831 = vcvt.s32.f32 %v751
        %v832 = vcvt.s32.f32 %v752
        %v833 = vcvt.s32.f32 %v753
        %v834 = vcvt.s32.f32 %v754
        %v835 = vcvt.s32.f32 %v755
        %v836 = vcvt.s32.f32 %v756
        %v837 = vcvt.s32.f32 %v757
        %v838 = vcvt.s32.f32 %v758
        %v839 = vcvt.s32.f32 %v759
        %v840 = vcvt.s32.f32 %v760
        %v841 = vcvt.s32.f32 %v761
        %v842 = vcvt.s32.f32 %v762
        %v843 = vcvt.s32.f32 %v763
        %v844 = vcvt.s32.f32 %v764
        %v845 = vcvt.s32.f32 %v765
        %v846 = vcvt.s32.f32 %v766
        %v847 = vcvt.s32.f32 %v767
        %v848 = vcvt.s32.f32 %v768
        %v849 = vcvt.s32.f32 %v769
        %v850 = vcvt.s32.f32 %v770
        %v851 = vcvt.s32.f32 %v771
        %v852 = vcvt.s32.f32 %v772
        %v853 = vcvt.s32.f32 %v773
        %v854 = vcvt.s32.f32 %v774
        %v855 = vcvt.s32.f32 %v775
        %v856 = vcvt.s32.f32 %v776
        %v857 = vcvt.s32.f32 %v777
        %v858 = vcvt.s32.f32 %v778
        %v859 = vcvt.s32.f32 %v779
        %v860 = vcvt.s32.f32 %v780
        %v861 = vcvt.s32.f32 %v781
        %v862 = vcvt.s32.f32 %v782
        %v863 = vcvt.s32.f32 %v783
        %v864 = vcvt.s32.f32 %v784
        %v865 = vcvt.s32.f32 %v785
        %v866 = vcvt.s32.f32 %v786
        %v867 = vcvt.s32.f32 %v787
        %v868 = vcvt.s32.f32 %v788
        %v869 = vcvt.s32.f32 %v789
        %v870 = vcvt.s32.f32 %v790
        %v871 = vcvt.s32.f32 %v791
        %v872 = vcvt.s32.f32 %v792
        %v873 = vcvt.s32.f32 %v793
        %v874 = vcvt.s32.f32 %v794
        %v875 = vcvt.s32.f32 %v795
        %v876 = vcvt.s32.f32 %v796
        %v877 = vcvt.s32.f32 %v797
        %v878 = vcvt.s32.f32 %v798
        %v879 = vcvt.s32.f32 %v799
        %v880 = vcvt.s32.f32 %v800
        %v881 = vcvt.s32.f32 %v801
        %v882 = vcvt.s32.f32 %v802
        %v883 = vcvt.s32.f32 %v803
        %v884 = vcvt.s32.f32 %v804
        %v885 = vcvt.s32.f32 %v805
        %v886 = vcvt.s32.f32 %v806
        %v887 = vcvt.s32.f32 %v807
        %v888 = vcvt.s32.f32 %v808
        %v889 = vcvt.s32.f32 %v809
        %v890 = vcvt.s32.f32 %v810
        %v891 = vcvt.s32.f32 %v811
        %v892 = vcvt.s32.f32 %v812
        %v893 = vpack.c.bf16 %v814, %v813
        %v894 = vpack.c.bf16 %v816, %v815
        %v895 = vpack.c.bf16 %v818, %v817
        %v896 = vpack.c.bf16 %v820, %v819
        %v897 = vpack.c.bf16 %v822, %v821
        %v898 = vpack.c.bf16 %v824, %v823
        %v899 = vpack.c.bf16 %v826, %v825
        %v900 = vpack.c.bf16 %v828, %v827
        %v901 = vpack.c.bf16 %v830, %v829
        %v902 = vpack.c.bf16 %v832, %v831
        %v903 = vpack.c.bf16 %v834, %v833
        %v904 = vpack.c.bf16 %v836, %v835
        %v905 = vpack.c.bf16 %v838, %v837
        %v906 = vpack.c.bf16 %v840, %v839
        %v907 = vpack.c.bf16 %v842, %v841
        %v908 = vpack.c.bf16 %v844, %v843
        %v909 = vpack.c.bf16 %v846, %v845
        %v910 = vpack.c.bf16 %v848, %v847
        %v911 = vpack.c.bf16 %v850, %v849
        %v912 = vpack.c.bf16 %v852, %v851
        %v913 = vpack.c.bf16 %v854, %v853
        %v914 = vpack.c.bf16 %v856, %v855
        %v915 = vpack.c.bf16 %v858, %v857
        %v916 = vpack.c.bf16 %v860, %v859
        %v917 = vpack.c.bf16 %v862, %v861
        %v918 = vpack.c.bf16 %v864, %v863
        %v919 = vpack.c.bf16 %v866, %v865
        %v920 = vpack.c.bf16 %v868, %v867
        %v921 = vpack.c.bf16 %v870, %v869
        %v922 = vpack.c.bf16 %v872, %v871
        %v923 = vpack.c.bf16 %v874, %v873
        %v924 = vpack.c.bf16 %v876, %v875
        %v925 = vpack.c.bf16 %v878, %v877
        %v926 = vpack.c.bf16 %v880, %v879
        %v927 = vpack.c.bf16 %v882, %v881
        %v928 = vpack.c.bf16 %v884, %v883
        %v929 = vpack.c.bf16 %v886, %v885
        %v930 = vpack.c.bf16 %v888, %v887
        %v931 = vpack.c.bf16 %v890, %v889
        %v932 = vpack.c.bf16 %v892, %v891
        %v933 = vld [vmem:[#allocation7] sm:$0xff]
        %v934 = vld [vmem:[#allocation7 + $0x8] sm:$0xff]
        %v935 = vld [vmem:[#allocation7 + $0x10] sm:$0xf]
        %v936 = vld [vmem:[#allocation7 + $0x14] sm:$0xff]
        %v937 = vld [vmem:[#allocation7 + $0x1c] sm:$0xff]
        %v938 = vld [vmem:[#allocation7 + $0x24] sm:$0xf]
        %v939 = vld [vmem:[#allocation7 + $0x28] sm:$0xff]
        %v940 = vld [vmem:[#allocation7 + $0x30] sm:$0xff]
        %v941 = vld [vmem:[#allocation7 + $0x38] sm:$0xf]
        %v942 = vld [vmem:[#allocation7 + $0x3c] sm:$0xff]
        %v943 = vld [vmem:[#allocation7 + $0x44] sm:$0xff]
        %v944 = vld [vmem:[#allocation7 + $0x4c] sm:$0xf]
        %v945 = vld [vmem:[#allocation8] sm:$0xff]
        %v946 = vld [vmem:[#allocation8 + $0x8] sm:$0xff]
        %v947 = vld [vmem:[#allocation8 + $0x10] sm:$0xf]
        %v948 = vld [vmem:[#allocation8 + $0x14] sm:$0xff]
        %v949 = vld [vmem:[#allocation8 + $0x1c] sm:$0xff]
        %v950 = vld [vmem:[#allocation8 + $0x24] sm:$0xf]
        %v951 = vld [vmem:[#allocation8 + $0x28] sm:$0xff]
        %v952 = vld [vmem:[#allocation8 + $0x30] sm:$0xff]
        %v953 = vld [vmem:[#allocation8 + $0x38] sm:$0xf]
        %v954 = vld [vmem:[#allocation8 + $0x3c] sm:$0xff]
        %v955 = vld [vmem:[#allocation8 + $0x44] sm:$0xff]
        %v956 = vld [vmem:[#allocation8 + $0x4c] sm:$0xf]
        %v969 = vunpack.c.l.b16 %v945
        %v970 = vunpack.c.h.b16 %v945
        %v971 = vunpack.c.l.b16 %v946
        %v972 = vunpack.c.h.b16 %v946
        %v973 = vunpack.c.l.b16 %v947
        %v974 = vunpack.c.l.b16 %v948
        %v975 = vunpack.c.h.b16 %v948
        %v976 = vunpack.c.l.b16 %v949
        %v977 = vunpack.c.h.b16 %v949
        %v978 = vunpack.c.l.b16 %v950
        %v979 = vunpack.c.l.b16 %v951
        %v980 = vunpack.c.h.b16 %v951
        %v981 = vunpack.c.l.b16 %v952
        %v982 = vunpack.c.h.b16 %v952
        %v983 = vunpack.c.l.b16 %v953
        %v984 = vunpack.c.l.b16 %v954
        %v985 = vunpack.c.h.b16 %v954
        %v986 = vunpack.c.l.b16 %v955
        %v987 = vunpack.c.h.b16 %v955
        %v988 = vunpack.c.l.b16 %v956
        %v989 = vpack.c.b16 %v974, %v969
        %v990 = vpack.c.b16 %v975, %v970
        %v991 = vpack.c.b16 %v976, %v971
        %v992 = vpack.c.b16 %v977, %v972
        %v993 = vpack.c.b16 %v978, %v973
        %v994 = vpack.c.b16 %v984, %v979
        %v995 = vpack.c.b16 %v985, %v980
        %v996 = vpack.c.b16 %v986, %v981
        %v997 = vpack.c.b16 %v987, %v982
        %v998 = vpack.c.b16 %v988, %v983
        %1009 = vmatpush.bf16.msra.mxu0 %v900
        %1010 = vmatpush.bf16.msra.mxu0 %v899
        %1011 = vmatpush.bf16.msra.mxu0 %v898
        %1012 = vmatpush.bf16.msra.mxu0 %v897
        %1013 = vmatpush.bf16.msra.mxu0 %v896
        %1014 = vmatpush.bf16.msra.mxu0 %v895
        %1015 = vmatpush.bf16.msra.mxu0 %v894
        %1016 = vmatpush.bf16.msra.mxu0 %v893
        %1017 = vmatmul.bf16.gmra.mxu0 %v989
        %v1018 = vpop.f32.mrf.mxu0
        %v1019 = vadd.f32 0.0, %v1018
        %v1020 = vpop.f32.mrf.mxu0
        %v1021 = vadd.f32 0.0, %v1020
        %1022 = vmatmul.bf16.gmra.mxu0 %v994
        %v1023 = vpop.f32.mrf.mxu0
        %v1024 = vadd.f32 0.0, %v1023
        %v1025 = vpop.f32.mrf.mxu0
        %v1026 = vadd.f32 0.0, %v1025
        %1027 = vdwg.mxu0
        %1028 = vmatpush.bf16.msra.mxu0 %v908
        %1029 = vmatpush.bf16.msra.mxu0 %v907
        %1030 = vmatpush.bf16.msra.mxu0 %v906
        %1031 = vmatpush.bf16.msra.mxu0 %v905
        %1032 = vmatpush.bf16.msra.mxu0 %v904
        %1033 = vmatpush.bf16.msra.mxu0 %v903
        %1034 = vmatpush.bf16.msra.mxu0 %v902
        %1035 = vmatpush.bf16.msra.mxu0 %v901
        %1036 = vmatmul.bf16.gmra.mxu0 %v990
        %v1037 = vpop.f32.mrf.mxu0
        %v1038 = vadd.f32 %v1019, %v1037
        %v1039 = vpop.f32.mrf.mxu0
        %v1040 = vadd.f32 %v1021, %v1039
        %1041 = vmatmul.bf16.gmra.mxu0 %v995
        %v1042 = vpop.f32.mrf.mxu0
        %v1043 = vadd.f32 %v1024, %v1042
        %v1044 = vpop.f32.mrf.mxu0
        %v1045 = vadd.f32 %v1026, %v1044
        %1046 = vdwg.mxu0
        %1047 = vmatpush.bf16.msra.mxu0 %v916
        %1048 = vmatpush.bf16.msra.mxu0 %v915
        %1049 = vmatpush.bf16.msra.mxu0 %v914
        %1050 = vmatpush.bf16.msra.mxu0 %v913
        %1051 = vmatpush.bf16.msra.mxu0 %v912
        %1052 = vmatpush.bf16.msra.mxu0 %v911
        %1053 = vmatpush.bf16.msra.mxu0 %v910
        %1054 = vmatpush.bf16.msra.mxu0 %v909
        %1055 = vmatmul.bf16.gmra.mxu0 %v991
        %v1056 = vpop.f32.mrf.mxu0
        %v1057 = vadd.f32 %v1038, %v1056
        %v1058 = vpop.f32.mrf.mxu0
        %v1059 = vadd.f32 %v1040, %v1058
        %1060 = vmatmul.bf16.gmra.mxu0 %v996
        %v1061 = vpop.f32.mrf.mxu0
        %v1062 = vadd.f32 %v1043, %v1061
        %v1063 = vpop.f32.mrf.mxu0
        %v1064 = vadd.f32 %v1045, %v1063
        %1065 = vdwg.mxu0
        %1066 = vmatpush.bf16.msra.mxu0 %v924
        %1067 = vmatpush.bf16.msra.mxu0 %v923
        %1068 = vmatpush.bf16.msra.mxu0 %v922
        %1069 = vmatpush.bf16.msra.mxu0 %v921
        %1070 = vmatpush.bf16.msra.mxu0 %v920
        %1071 = vmatpush.bf16.msra.mxu0 %v919
        %1072 = vmatpush.bf16.msra.mxu0 %v918
        %1073 = vmatpush.bf16.msra.mxu0 %v917
        %1074 = vmatmul.bf16.gmra.mxu0 %v992
        %v1075 = vpop.f32.mrf.mxu0
        %v1076 = vadd.f32 %v1057, %v1075
        %v1077 = vpop.f32.mrf.mxu0
        %v1078 = vadd.f32 %v1059, %v1077
        %1079 = vmatmul.bf16.gmra.mxu0 %v997
        %v1080 = vpop.f32.mrf.mxu0
        %v1081 = vadd.f32 %v1062, %v1080
        %v1082 = vpop.f32.mrf.mxu0
        %v1083 = vadd.f32 %v1064, %v1082
        %1084 = vdwg.mxu0
        %1085 = vmatpush.bf16.msra.mxu0 %v932
        %1086 = vmatpush.bf16.msra.mxu0 %v931
        %1087 = vmatpush.bf16.msra.mxu0 %v930
        %1088 = vmatpush.bf16.msra.mxu0 %v929
        %1089 = vmatpush.bf16.msra.mxu0 %v928
        %1090 = vmatpush.bf16.msra.mxu0 %v927
        %1091 = vmatpush.bf16.msra.mxu0 %v926
        %1092 = vmatpush.bf16.msra.mxu0 %v925
        %1093 = vmatmul.bf16.gmra.mxu0 %v993
        %v1094 = vpop.f32.mrf.mxu0
        %v1095 = vadd.f32 %v1076, %v1094
        %v1096 = vpop.f32.mrf.mxu0
        %v1097 = vadd.f32 %v1078, %v1096
        %1098 = vmatmul.bf16.gmra.mxu0 %v998
        %v1099 = vpop.f32.mrf.mxu0
        %v1100 = vadd.f32 %v1081, %v1099
        %v1101 = vpop.f32.mrf.mxu0
        %v1102 = vadd.f32 %v1083, %v1101
        %1103 = vdwg.mxu0
        %v1116 = vunpack.c.l.b16 %v933
        %v1117 = vunpack.c.h.b16 %v933
        %v1118 = vunpack.c.l.b16 %v934
        %v1119 = vunpack.c.h.b16 %v934
        %v1120 = vunpack.c.l.b16 %v935
        %v1121 = vunpack.c.l.b16 %v936
        %v1122 = vunpack.c.h.b16 %v936
        %v1123 = vunpack.c.l.b16 %v937
        %v1124 = vunpack.c.h.b16 %v937
        %v1125 = vunpack.c.l.b16 %v938
        %v1126 = vunpack.c.l.b16 %v939
        %v1127 = vunpack.c.h.b16 %v939
        %v1128 = vunpack.c.l.b16 %v940
        %v1129 = vunpack.c.h.b16 %v940
        %v1130 = vunpack.c.l.b16 %v941
        %v1131 = vunpack.c.l.b16 %v942
        %v1132 = vunpack.c.h.b16 %v942
        %v1133 = vunpack.c.l.b16 %v943
        %v1134 = vunpack.c.h.b16 %v943
        %v1135 = vunpack.c.l.b16 %v944
        %v1136 = vpack.c.b16 %v1121, %v1116
        %v1137 = vpack.c.b16 %v1122, %v1117
        %v1138 = vpack.c.b16 %v1123, %v1118
        %v1139 = vpack.c.b16 %v1124, %v1119
        %v1140 = vpack.c.b16 %v1125, %v1120
        %v1141 = vpack.c.b16 %v1131, %v1126
        %v1142 = vpack.c.b16 %v1132, %v1127
        %v1143 = vpack.c.b16 %v1133, %v1128
        %v1144 = vpack.c.b16 %v1134, %v1129
        %v1145 = vpack.c.b16 %v1135, %v1130
        %1156 = vmatpush.bf16.msra.mxu0 %v900
        %1157 = vmatpush.bf16.msra.mxu0 %v899
        %1158 = vmatpush.bf16.msra.mxu0 %v898
        %1159 = vmatpush.bf16.msra.mxu0 %v897
        %1160 = vmatpush.bf16.msra.mxu0 %v896
        %1161 = vmatpush.bf16.msra.mxu0 %v895
        %1162 = vmatpush.bf16.msra.mxu0 %v894
        %1163 = vmatpush.bf16.msra.mxu0 %v893
        %1164 = vmatmul.bf16.gmra.mxu0 %v1136
        %v1165 = vpop.f32.mrf.mxu0
        %v1166 = vadd.f32 %v1095, %v1165
        %v1167 = vpop.f32.mrf.mxu0
        %v1168 = vadd.f32 %v1097, %v1167
        %1169 = vmatmul.bf16.gmra.mxu0 %v1141
        %v1170 = vpop.f32.mrf.mxu0
        %v1171 = vadd.f32 %v1100, %v1170
        %v1172 = vpop.f32.mrf.mxu0
        %v1173 = vadd.f32 %v1102, %v1172
        %1174 = vdwg.mxu0
        %1175 = vmatpush.bf16.msra.mxu0 %v908
        %1176 = vmatpush.bf16.msra.mxu0 %v907
        %1177 = vmatpush.bf16.msra.mxu0 %v906
        %1178 = vmatpush.bf16.msra.mxu0 %v905
        %1179 = vmatpush.bf16.msra.mxu0 %v904
        %1180 = vmatpush.bf16.msra.mxu0 %v903
        %1181 = vmatpush.bf16.msra.mxu0 %v902
        %1182 = vmatpush.bf16.msra.mxu0 %v901
        %1183 = vmatmul.bf16.gmra.mxu0 %v1137
        %v1184 = vpop.f32.mrf.mxu0
        %v1185 = vadd.f32 %v1166, %v1184
        %v1186 = vpop.f32.mrf.mxu0
        %v1187 = vadd.f32 %v1168, %v1186
        %1188 = vmatmul.bf16.gmra.mxu0 %v1142
        %v1189 = vpop.f32.mrf.mxu0
        %v1190 = vadd.f32 %v1171, %v1189
        %v1191 = vpop.f32.mrf.mxu0
        %v1192 = vadd.f32 %v1173, %v1191
        %1193 = vdwg.mxu0
        %1194 = vmatpush.bf16.msra.mxu0 %v916
        %1195 = vmatpush.bf16.msra.mxu0 %v915
        %1196 = vmatpush.bf16.msra.mxu0 %v914
        %1197 = vmatpush.bf16.msra.mxu0 %v913
        %1198 = vmatpush.bf16.msra.mxu0 %v912
        %1199 = vmatpush.bf16.msra.mxu0 %v911
        %1200 = vmatpush.bf16.msra.mxu0 %v910
        %1201 = vmatpush.bf16.msra.mxu0 %v909
        %1202 = vmatmul.bf16.gmra.mxu0 %v1138
        %v1203 = vpop.f32.mrf.mxu0
        %v1204 = vadd.f32 %v1185, %v1203
        %v1205 = vpop.f32.mrf.mxu0
        %v1206 = vadd.f32 %v1187, %v1205
        %1207 = vmatmul.bf16.gmra.mxu0 %v1143
        %v1208 = vpop.f32.mrf.mxu0
        %v1209 = vadd.f32 %v1190, %v1208
        %v1210 = vpop.f32.mrf.mxu0
        %v1211 = vadd.f32 %v1192, %v1210
        %1212 = vdwg.mxu0
        %1213 = vmatpush.bf16.msra.mxu0 %v924
        %1214 = vmatpush.bf16.msra.mxu0 %v923
        %1215 = vmatpush.bf16.msra.mxu0 %v922
        %1216 = vmatpush.bf16.msra.mxu0 %v921
        %1217 = vmatpush.bf16.msra.mxu0 %v920
        %1218 = vmatpush.bf16.msra.mxu0 %v919
        %1219 = vmatpush.bf16.msra.mxu0 %v918
        %1220 = vmatpush.bf16.msra.mxu0 %v917
        %1221 = vmatmul.bf16.gmra.mxu0 %v1139
        %v1222 = vpop.f32.mrf.mxu0
        %v1223 = vadd.f32 %v1204, %v1222
        %v1224 = vpop.f32.mrf.mxu0
        %v1225 = vadd.f32 %v1206, %v1224
        %1226 = vmatmul.bf16.gmra.mxu0 %v1144
        %v1227 = vpop.f32.mrf.mxu0
        %v1228 = vadd.f32 %v1209, %v1227
        %v1229 = vpop.f32.mrf.mxu0
        %v1230 = vadd.f32 %v1211, %v1229
        %1231 = vdwg.mxu0
        %1232 = vmatpush.bf16.msra.mxu0 %v932
        %1233 = vmatpush.bf16.msra.mxu0 %v931
        %1234 = vmatpush.bf16.msra.mxu0 %v930
        %1235 = vmatpush.bf16.msra.mxu0 %v929
        %1236 = vmatpush.bf16.msra.mxu0 %v928
        %1237 = vmatpush.bf16.msra.mxu0 %v927
        %1238 = vmatpush.bf16.msra.mxu0 %v926
        %1239 = vmatpush.bf16.msra.mxu0 %v925
        %1240 = vmatmul.bf16.gmra.mxu0 %v1140
        %v1241 = vpop.f32.mrf.mxu0
        %v1242 = vadd.f32 %v1223, %v1241
        %v1243 = vpop.f32.mrf.mxu0
        %v1244 = vadd.f32 %v1225, %v1243
        %1245 = vmatmul.bf16.gmra.mxu0 %v1145
        %v1246 = vpop.f32.mrf.mxu0
        %v1247 = vadd.f32 %v1228, %v1246
        %v1248 = vpop.f32.mrf.mxu0
        %v1249 = vadd.f32 %v1230, %v1248
        %1250 = vdwg.mxu0
        %v1251 = vmax.f32 %v1242, 0.0
        %v1252 = vmax.f32 %v1244, 0.0
        %v1253 = vmax.f32 %v1247, 0.0
        %v1254 = vmax.f32 %v1249, 0.0
        %v1255 = vld [vmem:[%s4] sm:$0xff]
        %v1256 = vld [vmem:[%s4 + $0x8] sm:$0xff]
        %v1257 = vld [vmem:[%s4 + $0x10] sm:$0xff]
        %v1258 = vld [vmem:[%s4 + $0x18] sm:$0xff]
        %v1259 = vld [vmem:[%s5] sm:$0xff]
        %v1260 = vld [vmem:[%s5 + $0x8] sm:$0xff]
        %v1261 = vld [vmem:[%s5 + $0x10] sm:$0xff]
        %v1262 = vld [vmem:[%s5 + $0x18] sm:$0xff]
        %1264 = vset.pattern.permute.xlu0 0
        %1265 = vperm.xlu0 %1264, %v1259
        %v1266 = vpop.permute.xlu0 %1265
        %1269 = vset.pattern.permute.xlu0 0
        %1270 = vperm.xlu0 %1269, %v1260
        %v1271 = vpop.permute.xlu0 %1270
        %1274 = vset.pattern.permute.xlu0 0
        %1275 = vperm.xlu0 %1274, %v1261
        %v1276 = vpop.permute.xlu0 %1275
        %1279 = vset.pattern.permute.xlu0 0
        %1280 = vperm.xlu0 %1279, %v1262
        %v1281 = vpop.permute.xlu0 %1280
        %vm1283 = vcmask 261120
        %v1285 = vsel %vm1283, %v1255, 0
        %v1288 = vsel %vm1283, %v1256, 0
        %v1291 = vsel %vm1283, %v1257, 0
        %v1294 = vsel %vm1283, %v1258, 0
        %1296 = vmatpush.msra.mxu0 0.0
        %1297 = vmatpush.msra.mxu0 0.0
        %1298 = vmatpush.msra.mxu0 0.0
        %1299 = vmatpush.msra.mxu0 0.0
        %1300 = vmatpush.msra.mxu0 0.0
        %1301 = vmatpush.msra.mxu0 0.0
        %1302 = vmatpush.msra.mxu0 0.0
        %1303 = vmatpush.msra.mxu0 0.0
        %1304 = vmatpush.msra.mxu0 0.0
        %1305 = vmatpush.msra.mxu0 0.0
        %1306 = vmatpush.msra.mxu0 0.0
        %1307 = vmatpush.msra.mxu0 0.0
        %1308 = vmatpush.msra.mxu0 %v1254
        %1309 = vmatpush.msra.mxu0 %v1253
        %1310 = vmatpush.msra.mxu0 %v1252
        %1311 = vmatpush.msra.mxu0 %v1251
        %1312 = vmatmul.f32.gmra.mxu0 %v1285
        %v1313 = vpop.f32.mrf.mxu0
        %v1314 = vadd.f32 %v1266, %v1313
        %1315 = vmatmul.f32.gmra.mxu0 %v1288
        %v1316 = vpop.f32.mrf.mxu0
        %v1317 = vadd.f32 %v1271, %v1316
        %1318 = vmatmul.f32.gmra.mxu0 %v1291
        %v1319 = vpop.f32.mrf.mxu0
        %v1320 = vadd.f32 %v1276, %v1319
        %1321 = vmatmul.f32.gmra.mxu0 %v1294
        %v1322 = vpop.f32.mrf.mxu0
        %v1323 = vadd.f32 %v1281, %v1322
        %1324 = vdwg.mxu0
        %v1325 = vmax.f32 %v1314, 0.0
        %v1326 = vmax.f32 %v1317, 0.0
        %v1327 = vmax.f32 %v1320, 0.0
        %v1328 = vmax.f32 %v1323, 0.0
        %v1329 = vld [vmem:[%s6] sm:$0xff]
        %v1330 = vld [vmem:[%s6 + $0x8] sm:$0xff]
        %v1331 = vld [vmem:[%s6 + $0x10] sm:$0xff]
        %v1332 = vld [vmem:[%s6 + $0x18] sm:$0xff]
        %v1333 = vld [vmem:[%s7] sm:$0xff]
        %v1334 = vld [vmem:[%s7 + $0x8] sm:$0xff]
        %v1335 = vld [vmem:[%s7 + $0x10] sm:$0xff]
        %v1336 = vld [vmem:[%s7 + $0x18] sm:$0xff]
        %1338 = vset.pattern.permute.xlu0 0
        %1339 = vperm.xlu0 %1338, %v1333
        %v1340 = vpop.permute.xlu0 %1339
        %1343 = vset.pattern.permute.xlu0 0
        %1344 = vperm.xlu0 %1343, %v1334
        %v1345 = vpop.permute.xlu0 %1344
        %1348 = vset.pattern.permute.xlu0 0
        %1349 = vperm.xlu0 %1348, %v1335
        %v1350 = vpop.permute.xlu0 %1349
        %1353 = vset.pattern.permute.xlu0 0
        %1354 = vperm.xlu0 %1353, %v1336
        %v1355 = vpop.permute.xlu0 %1354
        %v1358 = vsel %vm1283, %v1329, 0
        %v1361 = vsel %vm1283, %v1330, 0
        %v1364 = vsel %vm1283, %v1331, 0
        %v1367 = vsel %vm1283, %v1332, 0
        %1369 = vmatpush.msra.mxu0 0.0
        %1370 = vmatpush.msra.mxu0 0.0
        %1371 = vmatpush.msra.mxu0 0.0
        %1372 = vmatpush.msra.mxu0 0.0
        %1373 = vmatpush.msra.mxu0 0.0
        %1374 = vmatpush.msra.mxu0 0.0
        %1375 = vmatpush.msra.mxu0 0.0
        %1376 = vmatpush.msra.mxu0 0.0
        %1377 = vmatpush.msra.mxu0 0.0
        %1378 = vmatpush.msra.mxu0 0.0
        %1379 = vmatpush.msra.mxu0 0.0
        %1380 = vmatpush.msra.mxu0 0.0
        %1381 = vmatpush.msra.mxu0 %v1328
        %1382 = vmatpush.msra.mxu0 %v1327
        %1383 = vmatpush.msra.mxu0 %v1326
        %1384 = vmatpush.msra.mxu0 %v1325
        %1385 = vmatmul.f32.gmra.mxu0 %v1358
        %v1386 = vpop.f32.mrf.mxu0
        %v1387 = vadd.f32 %v1340, %v1386
        %1388 = vmatmul.f32.gmra.mxu0 %v1361
        %v1389 = vpop.f32.mrf.mxu0
        %v1390 = vadd.f32 %v1345, %v1389
        %1391 = vmatmul.f32.gmra.mxu0 %v1364
        %v1392 = vpop.f32.mrf.mxu0
        %v1393 = vadd.f32 %v1350, %v1392
        %1394 = vmatmul.f32.gmra.mxu0 %v1367
        %v1395 = vpop.f32.mrf.mxu0
        %v1396 = vadd.f32 %v1355, %v1395
        %1397 = vdwg.mxu0
        %v1398 = vld [vmem:[%s360] sm:$0x1]
        %v1400 = vperm.slane %v1398, 0
        %v1402 = vmul.f32 %v1387, %v1400
        %v1403 = vmul.f32 %v1390, %v1400
        %v1404 = vmul.f32 %v1393, %v1400
        %v1405 = vmul.f32 %v1396, %v1400
        %1406 = vst [vmem:[%s406] sm:$0xff] %v1402
        %1407 = vst [vmem:[%s406 + $0x8] sm:$0xff] %v1403
        %1408 = vst [vmem:[%s406 + $0x10] sm:$0xff] %v1404
        %1409 = vst [vmem:[%s406 + $0x18] sm:$0xff] %v1405
        %s1410 = sand.u32 %s233, 1
        %s1411 = scalar_lea.sflag [#allocation4], %s1410
        %s1412 = sand.u32 %s233, 1
        %s1413 = smul.addr %s1412, 32
        %s1414 = scalar_lea.vmem [#allocation10], %s1413
        // Predicated region
        $region69: #{tpu_custom_call.1} parent=51 // pred_check
          %p1415 = pneg %p243
        $region70: #{tpu_custom_call.1} parent=51 // pred_check_branch
          %1417 = sbr.rel (%p1415) target = $region72
        $region71: #{tpu_custom_call.1} parent=51 // pred_region
          %1419 = vsyncadd %s1411, 0
          %s1420 = smul.addr %s33, 4
          %s1421 = sadd.s32 %s34, %s1420
          %s1422 = smul.addr %s1421, 8
          %s1423 = scalar_lea.hbm %s8, %s1422
          %s1424 = sshll.u32 %s1414, 4
          %s1425 = int_to_ptr.vmem [resolvable:$true] %s1424
          %s1426 = sshll.u32 %s1423, 4
          %s1427 = int_to_ptr.hbm [resolvable:$true] %s1426
          %1432 = dma.vmem_to_hbm [thread:$0]  %s1425, 512, %s1427, %s1411, 128, 128, 8
        $region72: #{tpu_custom_call.1} parent=51 // pred_fallthru
          _
      $region52: #{tpu_custom_call.1} parent=5 // pred_fallthru
        _
      %p1433 = scmp.le.s32.totalorder 2, %s24
      // Predicated region
      $region73: #{tpu_custom_call.1} parent=5 // pred_check
        %p1434 = pneg %p1433
      $region74: #{tpu_custom_call.1} parent=5 // pred_check_branch
        %1436 = sbr.rel (%p1434) target = $region76
      $region75: #{tpu_custom_call.1} parent=5 // pred_region
        %s1437 = ssub.s32 %s24, 2
        // Predicated region
        $region77: #{tpu_custom_call.1} parent=75 // pred_check
          %p1438 = pneg %p249
        $region78: #{tpu_custom_call.1} parent=75 // pred_check_branch
          %1440 = sbr.rel (%p1438) target = $region80
        $region79: #{tpu_custom_call.1} parent=75 // pred_region
          %s1441 = sand.u32 %s234, 1
          %s1442 = scalar_lea.sflag [#allocation4], %s1441
          %s1443 = sand.u32 %s234, 1
          %s1444 = smul.addr %s1443, 32
          %s1445 = scalar_lea.vmem [#allocation10], %s1444
          %1447 = dma.done %s1442, 512
        $region80: #{tpu_custom_call.1} parent=75 // pred_fallthru
          _
      $region76: #{tpu_custom_call.1} parent=5 // pred_fallthru
        _
    $region6: #{tpu_custom_call.1} parent=1 // loop_footer
      %s28 = sadd.s32 1, %s24
    $region7: #{tpu_custom_call.1} parent=1 // loop_footer_branch
      %23 = sbr.rel target = $region3
    $region8: #{tpu_custom_call.1} parent=1 // loop_exit
      _
    %1448 = vsyncpa [#allocation3], 1
    %s1449 = scalar_lea.sflag [#allocation3], 1
    %1450 = vsyncpa %s1449, 1
    %1451 = vsyncpa [#allocation6], 1
    %s1452 = scalar_lea.sflag [#allocation6], 1
    %1453 = vsyncpa %s1452, 1
    %1454 = vsyncpa [#allocation9], 1
    %1455 = vsyncpa [#allocation4], 1
    %s1456 = scalar_lea.sflag [#allocation4], 1
    %1457 = vsyncpa %s1456, 1

</llo_original>
